<compile_context>
chip_gen: v7x
topology: tpu7x:2x2x1
jax: 0.10.0
libtpu: 0.0.40
codegen_flags: <defaults>
</compile_context>

<pallas_src>
import functools

import jax
import jax.numpy as jnp
import numpy as np
from jax.experimental import pallas as pl
from jax.experimental.pallas import tpu as pltpu


# ----------------------------------------------------------------------------
# Activation functions (mirrors TorchMLP.get_activation_function).
# Feature axis is the LAST axis (same as torch's [batch, features] layout).
# ----------------------------------------------------------------------------
def _apply_activation(x, name, *, approx_recip=False):
    name = name.lower()
    if name == "relu":
        return jnp.maximum(x, 0.0)
    if name == "elu":                                      # nn.ELU(alpha=1.0)
        return jnp.where(x > 0, x, jnp.expm1(x))
    if name == "leaky_relu":                               # nn.LeakyReLU(0.2)
        return jnp.where(x > 0, x, 0.2 * x)
    if name == "tanh":
        return jnp.tanh(x)
    if name == "sigmoid":
        denom = 1.0 + jnp.exp(-x)
        if approx_recip:
            return pl.reciprocal(denom, approx=True)       # EUP slot
        return 1.0 / denom
    if name == "softmax":                                  # nn.Softmax over features
        e = jnp.exp(x - jnp.max(x, axis=-1, keepdims=True))
        s = jnp.sum(e, axis=-1, keepdims=True)
        if approx_recip:
            return e * pl.reciprocal(s, approx=True)
        return e / s
    if name == "linear":
        return x
    raise ValueError(f"unsupported activation: {name}")


# ----------------------------------------------------------------------------
# Kernel: fused MLP forward for one batch tile (natural [tile, features] layout).
# refs = (x_ref, wT0, b0, wT1, b1, ..., wT_out, b_out, out_ref)
#   x_ref  : [batch_tile, n_inputs]   (f32)
#   wT_ref : [in, out]                (bf16, weight pre-transposed in wrapper)
#   b_ref  : [1, out]                 (f32)
#   out_ref: [batch_tile, n_outputs]
# ----------------------------------------------------------------------------
def _mlp_kernel(activations, output_activation, n_hidden_layers, *refs):
    x_ref = refs[0]
    out_ref = refs[-1]
    prm = refs[1:-1]

    h = x_ref[...].astype(jnp.float32)                     # [tile, n_in]
    # hidden layers: Linear -> activation (dropout==0.0 -> no dropout layer)
    for j in range(n_hidden_layers):
        wT = prm[2 * j][...]                               # bf16 [in, out]
        b = prm[2 * j + 1][...]                            # f32  [1, out]
        h = jnp.dot(h.astype(jnp.bfloat16), wT,
                    preferred_element_type=jnp.float32) + b
        h = _apply_activation(h, activations[j], approx_recip=True)
    # output layer: exact reciprocal -> no approximation on predictions
    wT = prm[-2][...]
    b = prm[-1][...]
    h = jnp.dot(h.astype(jnp.bfloat16), wT,
                preferred_element_type=jnp.float32) + b
    h = _apply_activation(h, output_activation, approx_recip=False)
    out_ref[...] = h.astype(out_ref.dtype)


# ----------------------------------------------------------------------------
# Wrapper
# ----------------------------------------------------------------------------
_TRANSCENDENTALS_PER_ELEM = {
    "relu": 0, "leaky_relu": 0, "linear": 0,
    "elu": 1, "tanh": 1, "sigmoid": 2, "softmax": 2,
}


def _round_up(n, m):
    return -(-n // m) * m


def _choose_batch_tile(B, desired, multiple=256):
    """Largest multiple-of-`multiple` tile <= desired that still leaves >= 2
    grid steps whenever B allows (so the 'parallel' batch axis can feed both
    v7x TensorCores)."""
    half = _round_up(max(1, -(-B // 2)), multiple)         # ceil(B/2), rounded up
    tile = min(int(desired), half)
    tile = max(multiple, (tile // multiple) * multiple)
    return tile


def mlp_forward_pallas(x, params, activations, output_activation, *, batch_tile=2048):
    """x: [B, n_inputs] f32; params: list of (W [out, in] torch layout, b [out])."""
    B, n_in = x.shape
    n_out = params[-1][0].shape[0]
    n_hidden = len(params) - 1
    assert len(activations) == n_hidden

    tile = _choose_batch_tile(B, batch_tile)
    n_tiles = pl.cdiv(B, tile)                             # uneven tiling, no pad

    # Weights -> bf16 [in, out] (MXU rhs), biases -> f32 rows [1, out].
    # Tiny one-time relayouts; the big x / out tensors are never touched here.
    flat_params = []
    for w, b in params:
        flat_params.append(jnp.asarray(w, jnp.bfloat16).T)
        flat_params.append(jnp.asarray(b, jnp.float32).reshape(1, -1))
    # TODO(synk): for deep HPO architectures, pack all weights/biases into one
    # resident slab each to cut per-layer startup DMAs (negligible at 3 layers).

    # x / out tiled over the batch (sublane) axis; every weight / bias is a
    # single full block with a constant index_map -> DMA'd once, VMEM-resident.
    x_spec = pl.BlockSpec((tile, n_in), lambda i: (i, 0))
    out_spec = pl.BlockSpec((tile, n_out), lambda i: (i, 0))
    param_specs = [pl.BlockSpec(p.shape, lambda i: (0, 0)) for p in flat_params]

    # ---- advisory cost estimate -------------------------------------------
    acts = [a.lower() for a in activations] + [output_activation.lower()]
    flops = 0
    transcendentals = 0
    for (w, _), a in zip(params, acts):
        fo, fi = w.shape
        flops += 2 * B * fo * fi
        transcendentals += B * fo * _TRANSCENDENTALS_PER_ELEM.get(a, 1)
    bytes_accessed = (
        int(x.size) * x.dtype.itemsize
        + sum(int(p.size) * p.dtype.itemsize for p in flat_params)
        + B * n_out * x.dtype.itemsize
    )

    # ---- generation-aware VMEM budget ---------------------------------------
    try:
        vmem_cap = int(pltpu.get_tpu_info().vmem_capacity_bytes)
    except Exception:
        vmem_cap = 64 * 1024 * 1024                        # v7x-safe fallback
    cap = min(int(0.75 * vmem_cap), 64 * 1024 * 1024)      # ~48 MiB on v7x

    # VMEM footprints use (8, 128)-padded shapes.
    io_bytes = 2 * tile * (_round_up(n_in, 128) + _round_up(n_out, 128)) * 4
    param_bytes = sum(
        2 * _round_up(p.shape[0], 8) * _round_up(p.shape[1], 128) * p.dtype.itemsize
        for p in flat_params)
    max_width = max([n_in, n_out] + [w.shape[0] for w, _ in params])
    act_bytes = 4 * tile * _round_up(max_width, 128) * 4
    vmem_need = io_bytes + param_bytes + act_bytes
    vmem_limit_bytes = int(min(cap, 2 * vmem_need + (4 << 20)))

    kernel = functools.partial(
        _mlp_kernel,
        tuple(a.lower() for a in activations),
        output_activation.lower(),
        n_hidden,
    )

    return pl.pallas_call(
        kernel,
        out_shape=jax.ShapeDtypeStruct((B, n_out), x.dtype),
        grid_spec=pltpu.PrefetchScalarGridSpec(
            num_scalar_prefetch=0,
            grid=(n_tiles,),
            in_specs=[x_spec] + param_specs,
            out_specs=out_spec,
        ),
        compiler_params=pltpu.CompilerParams(
            dimension_semantics=("parallel",),   # batch axis shards across v7x TCs
            vmem_limit_bytes=vmem_limit_bytes,
        ),
        cost_estimate=pl.CostEstimate(
            flops=int(flops),
            transcendentals=int(transcendentals),
            bytes_accessed=int(bytes_accessed),
        ),
    )(x, *flat_params)


# ----------------------------------------------------------------------------
# Parameter init (deterministic, mimics torch.nn.Linear default init:
# U(-1/sqrt(fan_in), +1/sqrt(fan_in)) for both weight and bias; torch layout)
# ----------------------------------------------------------------------------
def init_mlp_params(key, n_inputs, architecture, n_outputs):
    dims = [n_inputs] + list(architecture) + [n_outputs]
    params = []
    for fan_in, fan_out in zip(dims[:-1], dims[1:]):
        key, kw, kb = jax.random.split(key, 3)
        bound = 1.0 / np.sqrt(fan_in)
        w = jax.random.uniform(kw, (fan_out, fan_in), jnp.float32, -bound, bound)
        b = jax.random.uniform(kb, (fan_out,), jnp.float32, -bound, bound)
        params.append((w, b))
    return params


# Pure-JAX (f32, exact) reference for correctness checking.
def mlp_forward_ref(x, params, activations, output_activation):
    h = x.astype(jnp.float32)
    for j, (w, b) in enumerate(params[:-1]):
        h = h @ w.T + b
        h = _apply_activation(h, activations[j], approx_recip=False)
    w, b = params[-1]
    h = h @ w.T + b
    return _apply_activation(h, output_activation, approx_recip=False)


if __name__ == "__main__":
    # Config consistent with TorchMLP.__init__ (only forward-relevant fields used).
    config = {
        "n_inputs": 4,
        "n_outputs": 3,
        "architecture": [32, 32],
        "activations": ["relu", "tanh"],
        "dropouts": [0.0, 0.0],        # 0.0 -> nn.Dropout layer is never added
        "output_activation": "sigmoid",
    }
    # TODO(synk): dropouts > 0.0 (training-mode stochastic dropout) and the Adam/MSE
    # training loop (fit/train_step) are not part of the forward-pass kernel.

    key = jax.random.PRNGKey(0)
    kp, kx = jax.random.split(key)

    params = init_mlp_params(
        kp, config["n_inputs"], config["architecture"], config["n_outputs"]
    )

    # Ragged batch: tile auto-clamps to 256 -> 2 uneven grid steps, exercising
    # the partial-block masking path and the 2-way 'parallel' grid.
    batch = 500
    x = jax.random.normal(kx, (batch, config["n_inputs"]), jnp.float32)

    out = mlp_forward_pallas(
        x, params, config["activations"], config["output_activation"],
        batch_tile=2048,
    )
    out = jax.block_until_ready(out)

    ref = mlp_forward_ref(x, params, config["activations"], config["output_activation"])
    # bf16 MXU operands -> loose-ish tolerance (documented precision cap vs f32 torch).
    np.testing.assert_allclose(np.asarray(out), np.asarray(ref), rtol=2e-2, atol=5e-3)

    print("KERNEL_OK")
</pallas_src>

<mosaic_0001>
module attributes {stable_mosaic.version = 11 : i64} {
  func.func @_mlp_kernel(%arg0: i32, %arg1: memref<256x4xf32, #tpu.memory_space<vmem>>, %arg2: memref<4x32xbf16, #tpu.memory_space<vmem>>, %arg3: memref<1x32xf32, #tpu.memory_space<vmem>>, %arg4: memref<32x32xbf16, #tpu.memory_space<vmem>>, %arg5: memref<1x32xf32, #tpu.memory_space<vmem>>, %arg6: memref<32x3xbf16, #tpu.memory_space<vmem>>, %arg7: memref<1x3xf32, #tpu.memory_space<vmem>>, %arg8: memref<256x3xf32, #tpu.memory_space<vmem>>) attributes {dimension_semantics = [#tpu.dimension_semantics<parallel>], iteration_bounds = array<i64: 2>, scalar_prefetch = 0 : i64, scratch_operands = 0 : i64, tpu.core_type = #tpu.core_type<tc>, window_params = [{transform_indices = @transform_0, window_bounds = array<i64: 256, 4>}, {pipeline_mode = #tpu.pipeline_mode<synchronous>, transform_indices = @transform_1, window_bounds = array<i64: 4, 32>}, {pipeline_mode = #tpu.pipeline_mode<synchronous>, transform_indices = @transform_2, window_bounds = array<i64: 1, 32>}, {pipeline_mode = #tpu.pipeline_mode<synchronous>, transform_indices = @transform_3, window_bounds = array<i64: 32, 32>}, {pipeline_mode = #tpu.pipeline_mode<synchronous>, transform_indices = @transform_4, window_bounds = array<i64: 1, 32>}, {pipeline_mode = #tpu.pipeline_mode<synchronous>, transform_indices = @transform_5, window_bounds = array<i64: 32, 3>}, {pipeline_mode = #tpu.pipeline_mode<synchronous>, transform_indices = @transform_6, window_bounds = array<i64: 1, 3>}, {transform_indices = @transform_7, window_bounds = array<i64: 256, 3>}]} {
    %c0 = arith.constant 0 : index
    %c0_0 = arith.constant 0 : index
    %0 = vector.load %arg1[%c0, %c0_0] : memref<256x4xf32, #tpu.memory_space<vmem>>, vector<256x4xf32>
    %c0_1 = arith.constant 0 : index
    %c0_2 = arith.constant 0 : index
    %1 = vector.load %arg2[%c0_1, %c0_2] : memref<4x32xbf16, #tpu.memory_space<vmem>>, vector<4x32xbf16>
    %c0_3 = arith.constant 0 : index
    %c0_4 = arith.constant 0 : index
    %2 = vector.load %arg3[%c0_3, %c0_4] : memref<1x32xf32, #tpu.memory_space<vmem>>, vector<1x32xf32>
    %3 = arith.truncf %0 : vector<256x4xf32> to vector<256x4xbf16>
    %cst = arith.constant dense<0.000000e+00> : vector<256x32xf32>
    %4 = tpu.matmul %3, %1, %cst {dimension_numbers = #tpu.dot_dimension_numbers<[1], [0], [0], [1], [0, 0, 1, 1], [], []>} : vector<256x4xbf16>, vector<4x32xbf16>, vector<256x32xf32> -> vector<256x32xf32>
    %5 = vector.broadcast %2 : vector<1x32xf32> to vector<256x32xf32>
    %6 = arith.addf %4, %5 : vector<256x32xf32>
    %cst_5 = arith.constant 0.000000e+00 : f32
    %7 = vector.broadcast %cst_5 : f32 to vector<256x32xf32>
    %8 = arith.maximumf %6, %7 : vector<256x32xf32>
    %c0_6 = arith.constant 0 : index
    %c0_7 = arith.constant 0 : index
    %9 = vector.load %arg4[%c0_6, %c0_7] : memref<32x32xbf16, #tpu.memory_space<vmem>>, vector<32x32xbf16>
    %c0_8 = arith.constant 0 : index
    %c0_9 = arith.constant 0 : index
    %10 = vector.load %arg5[%c0_8, %c0_9] : memref<1x32xf32, #tpu.memory_space<vmem>>, vector<1x32xf32>
    %11 = arith.truncf %8 : vector<256x32xf32> to vector<256x32xbf16>
    %cst_10 = arith.constant dense<0.000000e+00> : vector<256x32xf32>
    %12 = tpu.matmul %11, %9, %cst_10 {dimension_numbers = #tpu.dot_dimension_numbers<[1], [0], [0], [1], [0, 0, 1, 1], [], []>} : vector<256x32xbf16>, vector<32x32xbf16>, vector<256x32xf32> -> vector<256x32xf32>
    %13 = vector.broadcast %10 : vector<1x32xf32> to vector<256x32xf32>
    %14 = arith.addf %12, %13 : vector<256x32xf32>
    %15 = math.tanh %14 : vector<256x32xf32>
    %c0_11 = arith.constant 0 : index
    %c0_12 = arith.constant 0 : index
    %16 = vector.load %arg6[%c0_11, %c0_12] : memref<32x3xbf16, #tpu.memory_space<vmem>>, vector<32x3xbf16>
    %c0_13 = arith.constant 0 : index
    %c0_14 = arith.constant 0 : index
    %17 = vector.load %arg7[%c0_13, %c0_14] : memref<1x3xf32, #tpu.memory_space<vmem>>, vector<1x3xf32>
    %18 = arith.truncf %15 : vector<256x32xf32> to vector<256x32xbf16>
    %cst_15 = arith.constant dense<0.000000e+00> : vector<256x3xf32>
    %19 = tpu.matmul %18, %16, %cst_15 {dimension_numbers = #tpu.dot_dimension_numbers<[1], [0], [0], [1], [0, 0, 1, 1], [], []>} : vector<256x32xbf16>, vector<32x3xbf16>, vector<256x3xf32> -> vector<256x3xf32>
    %20 = vector.broadcast %17 : vector<1x3xf32> to vector<256x3xf32>
    %21 = arith.addf %19, %20 : vector<256x3xf32>
    %cst_16 = arith.constant 0.000000e+00 : f32
    %22 = vector.broadcast %cst_16 : f32 to vector<256x3xf32>
    %23 = arith.subf %22, %21 : vector<256x3xf32>
    %24 = math.exp %23 : vector<256x3xf32>
    %cst_17 = arith.constant 1.000000e+00 : f32
    %25 = vector.broadcast %cst_17 : f32 to vector<256x3xf32>
    %26 = arith.addf %25, %24 : vector<256x3xf32>
    %cst_18 = arith.constant 1.000000e+00 : f32
    %27 = vector.broadcast %cst_18 : f32 to vector<256x3xf32>
    %28 = arith.divf %27, %26 : vector<256x3xf32>
    %c0_19 = arith.constant 0 : index
    %c0_20 = arith.constant 0 : index
    %29 = vector.load %arg8[%c0_19, %c0_20] : memref<256x3xf32, #tpu.memory_space<vmem>>, vector<256x3xf32>
    tpu.vector_store %arg8[%c0_19, %c0_20], %28 {strides = array<i32>} : memref<256x3xf32, #tpu.memory_space<vmem>>, vector<256x3xf32>,
    return
  }
  func.func @transform_0(%arg0: i32) -> (i32, i32) {
    %c0_i32 = arith.constant 0 : i32
    %c0_i32_0 = arith.constant 0 : i32
    return %arg0, %c0_i32 : i32, i32
  }
  func.func @transform_1(%arg0: i32) -> (i32, i32) {
    %c0_i32 = arith.constant 0 : i32
    %c0_i32_0 = arith.constant 0 : i32
    %c0_i32_1 = arith.constant 0 : i32
    return %c0_i32, %c0_i32_0 : i32, i32
  }
  func.func @transform_2(%arg0: i32) -> (i32, i32) {
    %c0_i32 = arith.constant 0 : i32
    %c0_i32_0 = arith.constant 0 : i32
    %c0_i32_1 = arith.constant 0 : i32
    return %c0_i32, %c0_i32_0 : i32, i32
  }
  func.func @transform_3(%arg0: i32) -> (i32, i32) {
    %c0_i32 = arith.constant 0 : i32
    %c0_i32_0 = arith.constant 0 : i32
    %c0_i32_1 = arith.constant 0 : i32
    return %c0_i32, %c0_i32_0 : i32, i32
  }
  func.func @transform_4(%arg0: i32) -> (i32, i32) {
    %c0_i32 = arith.constant 0 : i32
    %c0_i32_0 = arith.constant 0 : i32
    %c0_i32_1 = arith.constant 0 : i32
    return %c0_i32, %c0_i32_0 : i32, i32
  }
  func.func @transform_5(%arg0: i32) -> (i32, i32) {
    %c0_i32 = arith.constant 0 : i32
    %c0_i32_0 = arith.constant 0 : i32
    %c0_i32_1 = arith.constant 0 : i32
    return %c0_i32, %c0_i32_0 : i32, i32
  }
  func.func @transform_6(%arg0: i32) -> (i32, i32) {
    %c0_i32 = arith.constant 0 : i32
    %c0_i32_0 = arith.constant 0 : i32
    %c0_i32_1 = arith.constant 0 : i32
    return %c0_i32, %c0_i32_0 : i32, i32
  }
  func.func @transform_7(%arg0: i32) -> (i32, i32) {
    %c0_i32 = arith.constant 0 : i32
    %c0_i32_0 = arith.constant 0 : i32
    return %arg0, %c0_i32 : i32, i32
  }
}

</mosaic_0001>

<llo_original>
// kernel: tpu_custom_call.1
$region0: #{tpu_custom_call.1}
  #allocation0 [shape = 'u32[]', space=smem, size = 0x4, offset = 0x4, fixed_abs, tag = 'smem constant byte address 0x4 - core index']
  #allocation1 [shape = 'u32[144,128]{1,0:T(1,128)}', space=vmem, size = 0x12000, scoped, tag = 'internal scratch']
  %s0 = inlined_call_operand.vmem [shape: f32[500,4], index: 0, kind: input, shape index: {}]
  %s1 = inlined_call_operand.vmem [shape: bf16[4,32], index: 1, kind: input, shape index: {}]
  %s2 = inlined_call_operand.vmem [shape: f32[1,32], index: 2, kind: input, shape index: {}]
  %s3 = inlined_call_operand.vmem [shape: bf16[32,32], index: 3, kind: input, shape index: {}]
  %s4 = inlined_call_operand.vmem [shape: f32[1,32], index: 4, kind: input, shape index: {}]
  %s5 = inlined_call_operand.vmem [shape: bf16[32,3], index: 5, kind: input, shape index: {}]
  %s6 = inlined_call_operand.vmem [shape: f32[1,3], index: 6, kind: input, shape index: {}]
  %s7 = inlined_call_operand.vmem [shape: f32[500,3], index: 7, kind: output, shape index: {}]
  %s8 = sld [smem:[#allocation0]]
  $region109: #{tpu_custom_call.1} parent=0
    _
  %s10 = ssub.s32 1, %s8
  %s11 = scalar_select 0, %s10, %s8
  $region1: #{tpu_custom_call.1} parent=0
    #allocation2 [shape = 'u8[262144]{0}', space=vmem, size = 0x40000, scoped, tag = 'output window, operand 0']
    loop: start=0, step=1, limit=4
    $region2: #{tpu_custom_call.1} parent=1 // loop_pre_header
      _
    $region3: #{tpu_custom_call.1} parent=1 // loop_header
      %s13 = sphi 0, %s17
      %p14 = scmp.ge.s32.totalorder %s13, 4
      %s23 = sphi 0, %s25
      %s26 = sphi 0, %s23
      %s27 = sphi 0, %s26
      %s43 = sphi 0, %s27
      %s47 = sphi 0, %s47
      %s49 = sphi 0, %s47
      %s50 = sphi 0, %s49
      %s64 = sphi 0, %s50
      %s68 = sphi 0, %s68
      %s70 = sphi 0, %s68
      %s71 = sphi 0, %s70
      %s85 = sphi 0, %s71
      %s89 = sphi 0, %s89
      %s91 = sphi 0, %s89
      %s92 = sphi 0, %s91
      %s106 = sphi 0, %s92
      %s110 = sphi 0, %s110
      %s112 = sphi 0, %s110
      %s113 = sphi 0, %s112
      %s127 = sphi 0, %s113
      %s131 = sphi 0, %s131
      %s133 = sphi 0, %s131
      %s134 = sphi 0, %s133
      %s148 = sphi 0, %s134
      %s152 = sphi 0, %s152
      %s154 = sphi 0, %s152
      %s155 = sphi 0, %s154
      %s169 = sphi 0, %s155
      %s175 = sphi 0, %s177
      %s178 = sphi 0, %s175
      %s179 = sphi 0, %s178
      %s195 = sphi 0, %s179
    $region4: #{tpu_custom_call.1} parent=1 // loop_header_branch
      %16 = sbr.rel (%p14) target = $region8
    $region5: #{tpu_custom_call.1} parent=1 // loop_body
      %s18 = ssub.s32 %s13, 1
      %s19 = ssub.s32 %s13, 2
      %s20 = sadd.s32 %s13, 1
      %s21 = ssub.s32 %s13, %s20
      %p22 = scmp.eq.s32.totalorder %s21, 0
      %s24 = sadd.s32 %s23, 1
      %s25 = scalar_select %p22, %s23, %s24
      %p28 = pneg %p22
      %p29 = scmp.eq.s32.totalorder %s13, 1
      %p30 = por %p28, %p29
      %p31 = scmp.ne.s32.totalorder %s23, %s26
      %p32 = scmp.eq.s32.totalorder %s13, 0
      %p33 = por %p31, %p32
      %p34 = scmp.ne.s32.totalorder %s23, %s26
      %p35 = scmp.eq.s32.totalorder %s18, 1
      %p36 = por %p34, %p35
      %p37 = scmp.ne.s32.totalorder %s26, %s27
      %p38 = scmp.eq.s32.totalorder %s18, 0
      %p39 = por %p37, %p38
      %p40 = scmp.ne.s32.totalorder %s26, %s27
      %p41 = scmp.eq.s32.totalorder %s19, 1
      %p42 = por %p40, %p41
      %p44 = scmp.ne.s32.totalorder %s27, %s43
      %p45 = scmp.eq.s32.totalorder %s19, 0
      %p46 = por %p44, %p45
      %s48 = sadd.s32 %s47, 1
      %p51 = scmp.eq.s32.totalorder %s13, 1
      %p52 = scmp.ne.s32.totalorder %s47, %s49
      %p53 = scmp.eq.s32.totalorder %s13, 0
      %p54 = por %p52, %p53
      %p55 = scmp.ne.s32.totalorder %s47, %s49
      %p56 = scmp.eq.s32.totalorder %s18, 1
      %p57 = por %p55, %p56
      %p58 = scmp.ne.s32.totalorder %s49, %s50
      %p59 = scmp.eq.s32.totalorder %s18, 0
      %p60 = por %p58, %p59
      %p61 = scmp.ne.s32.totalorder %s49, %s50
      %p62 = scmp.eq.s32.totalorder %s19, 1
      %p63 = por %p61, %p62
      %p65 = scmp.ne.s32.totalorder %s50, %s64
      %p66 = scmp.eq.s32.totalorder %s19, 0
      %p67 = por %p65, %p66
      %s69 = sadd.s32 %s68, 1
      %p72 = scmp.eq.s32.totalorder %s13, 1
      %p73 = scmp.ne.s32.totalorder %s68, %s70
      %p74 = scmp.eq.s32.totalorder %s13, 0
      %p75 = por %p73, %p74
      %p76 = scmp.ne.s32.totalorder %s68, %s70
      %p77 = scmp.eq.s32.totalorder %s18, 1
      %p78 = por %p76, %p77
      %p79 = scmp.ne.s32.totalorder %s70, %s71
      %p80 = scmp.eq.s32.totalorder %s18, 0
      %p81 = por %p79, %p80
      %p82 = scmp.ne.s32.totalorder %s70, %s71
      %p83 = scmp.eq.s32.totalorder %s19, 1
      %p84 = por %p82, %p83
      %p86 = scmp.ne.s32.totalorder %s71, %s85
      %p87 = scmp.eq.s32.totalorder %s19, 0
      %p88 = por %p86, %p87
      %s90 = sadd.s32 %s89, 1
      %p93 = scmp.eq.s32.totalorder %s13, 1
      %p94 = scmp.ne.s32.totalorder %s89, %s91
      %p95 = scmp.eq.s32.totalorder %s13, 0
      %p96 = por %p94, %p95
      %p97 = scmp.ne.s32.totalorder %s89, %s91
      %p98 = scmp.eq.s32.totalorder %s18, 1
      %p99 = por %p97, %p98
      %p100 = scmp.ne.s32.totalorder %s91, %s92
      %p101 = scmp.eq.s32.totalorder %s18, 0
      %p102 = por %p100, %p101
      %p103 = scmp.ne.s32.totalorder %s91, %s92
      %p104 = scmp.eq.s32.totalorder %s19, 1
      %p105 = por %p103, %p104
      %p107 = scmp.ne.s32.totalorder %s92, %s106
      %p108 = scmp.eq.s32.totalorder %s19, 0
      %p109 = por %p107, %p108
      %s111 = sadd.s32 %s110, 1
      %p114 = scmp.eq.s32.totalorder %s13, 1
      %p115 = scmp.ne.s32.totalorder %s110, %s112
      %p116 = scmp.eq.s32.totalorder %s13, 0
      %p117 = por %p115, %p116
      %p118 = scmp.ne.s32.totalorder %s110, %s112
      %p119 = scmp.eq.s32.totalorder %s18, 1
      %p120 = por %p118, %p119
      %p121 = scmp.ne.s32.totalorder %s112, %s113
      %p122 = scmp.eq.s32.totalorder %s18, 0
      %p123 = por %p121, %p122
      %p124 = scmp.ne.s32.totalorder %s112, %s113
      %p125 = scmp.eq.s32.totalorder %s19, 1
      %p126 = por %p124, %p125
      %p128 = scmp.ne.s32.totalorder %s113, %s127
      %p129 = scmp.eq.s32.totalorder %s19, 0
      %p130 = por %p128, %p129
      %s132 = sadd.s32 %s131, 1
      %p135 = scmp.eq.s32.totalorder %s13, 1
      %p136 = scmp.ne.s32.totalorder %s131, %s133
      %p137 = scmp.eq.s32.totalorder %s13, 0
      %p138 = por %p136, %p137
      %p139 = scmp.ne.s32.totalorder %s131, %s133
      %p140 = scmp.eq.s32.totalorder %s18, 1
      %p141 = por %p139, %p140
      %p142 = scmp.ne.s32.totalorder %s133, %s134
      %p143 = scmp.eq.s32.totalorder %s18, 0
      %p144 = por %p142, %p143
      %p145 = scmp.ne.s32.totalorder %s133, %s134
      %p146 = scmp.eq.s32.totalorder %s19, 1
      %p147 = por %p145, %p146
      %p149 = scmp.ne.s32.totalorder %s134, %s148
      %p150 = scmp.eq.s32.totalorder %s19, 0
      %p151 = por %p149, %p150
      %s153 = sadd.s32 %s152, 1
      %p156 = scmp.eq.s32.totalorder %s13, 1
      %p157 = scmp.ne.s32.totalorder %s152, %s154
      %p158 = scmp.eq.s32.totalorder %s13, 0
      %p159 = por %p157, %p158
      %p160 = scmp.ne.s32.totalorder %s152, %s154
      %p161 = scmp.eq.s32.totalorder %s18, 1
      %p162 = por %p160, %p161
      %p163 = scmp.ne.s32.totalorder %s154, %s155
      %p164 = scmp.eq.s32.totalorder %s18, 0
      %p165 = por %p163, %p164
      %p166 = scmp.ne.s32.totalorder %s154, %s155
      %p167 = scmp.eq.s32.totalorder %s19, 1
      %p168 = por %p166, %p167
      %p170 = scmp.ne.s32.totalorder %s155, %s169
      %p171 = scmp.eq.s32.totalorder %s19, 0
      %p172 = por %p170, %p171
      %s173 = ssub.s32 %s13, %s20
      %p174 = scmp.eq.s32.totalorder %s173, 0
      %s176 = sadd.s32 %s175, 1
      %s177 = scalar_select %p174, %s175, %s176
      %p180 = pneg %p174
      %p181 = scmp.eq.s32.totalorder %s13, 1
      %p182 = por %p180, %p181
      %p183 = scmp.ne.s32.totalorder %s175, %s178
      %p184 = scmp.eq.s32.totalorder %s13, 0
      %p185 = por %p183, %p184
      %p186 = scmp.ne.s32.totalorder %s175, %s178
      %p187 = scmp.eq.s32.totalorder %s18, 1
      %p188 = por %p186, %p187
      %p189 = scmp.ne.s32.totalorder %s178, %s179
      %p190 = scmp.eq.s32.totalorder %s18, 0
      %p191 = por %p189, %p190
      %p192 = scmp.ne.s32.totalorder %s178, %s179
      %p193 = scmp.eq.s32.totalorder %s19, 1
      %p194 = por %p192, %p193
      %p196 = scmp.ne.s32.totalorder %s179, %s195
      %p197 = scmp.eq.s32.totalorder %s19, 0
      %p198 = por %p196, %p197
      %p199 = scmp.le.s32.totalorder 1, %s13
      %p200 = scmp.lt.s32.totalorder %s13, 3
      %p201 = pnand %p199, %p200
      %p202 = pneg %p201
      // Predicated region
      $region9: #{tpu_custom_call.1} parent=5 // pred_check
        _
      $region10: #{tpu_custom_call.1} parent=5 // pred_check_branch
        %204 = sbr.rel (%p201) target = $region12
      $region11: #{tpu_custom_call.1} parent=5 // pred_region
        %s205 = ssub.s32 %s13, 1
        // Predicated region
        $region13: #{tpu_custom_call.1} parent=11 // pred_check
          %p206 = pneg %p60
        $region14: #{tpu_custom_call.1} parent=11 // pred_check_branch
          %208 = sbr.rel (%p206) target = $region16
        $region15: #{tpu_custom_call.1} parent=11 // pred_region
          _
        $region16: #{tpu_custom_call.1} parent=11 // pred_fallthru
          _
        // Predicated region
        $region17: #{tpu_custom_call.1} parent=11 // pred_check
          %p209 = pneg %p81
        $region18: #{tpu_custom_call.1} parent=11 // pred_check_branch
          %211 = sbr.rel (%p209) target = $region20
        $region19: #{tpu_custom_call.1} parent=11 // pred_region
          _
        $region20: #{tpu_custom_call.1} parent=11 // pred_fallthru
          _
        // Predicated region
        $region21: #{tpu_custom_call.1} parent=11 // pred_check
          %p212 = pneg %p102
        $region22: #{tpu_custom_call.1} parent=11 // pred_check_branch
          %214 = sbr.rel (%p212) target = $region24
        $region23: #{tpu_custom_call.1} parent=11 // pred_region
          _
        $region24: #{tpu_custom_call.1} parent=11 // pred_fallthru
          _
        // Predicated region
        $region25: #{tpu_custom_call.1} parent=11 // pred_check
          %p215 = pneg %p123
        $region26: #{tpu_custom_call.1} parent=11 // pred_check_branch
          %217 = sbr.rel (%p215) target = $region28
        $region27: #{tpu_custom_call.1} parent=11 // pred_region
          _
        $region28: #{tpu_custom_call.1} parent=11 // pred_fallthru
          _
        // Predicated region
        $region29: #{tpu_custom_call.1} parent=11 // pred_check
          %p218 = pneg %p144
        $region30: #{tpu_custom_call.1} parent=11 // pred_check_branch
          %220 = sbr.rel (%p218) target = $region32
        $region31: #{tpu_custom_call.1} parent=11 // pred_region
          _
        $region32: #{tpu_custom_call.1} parent=11 // pred_fallthru
          _
        // Predicated region
        $region33: #{tpu_custom_call.1} parent=11 // pred_check
          %p221 = pneg %p165
        $region34: #{tpu_custom_call.1} parent=11 // pred_check_branch
          %223 = sbr.rel (%p221) target = $region36
        $region35: #{tpu_custom_call.1} parent=11 // pred_region
          _
        $region36: #{tpu_custom_call.1} parent=11 // pred_fallthru
          _
      $region12: #{tpu_custom_call.1} parent=5 // pred_fallthru
        _
      %p224 = scmp.lt.s32.totalorder %s13, 2
      // Predicated region
      $region37: #{tpu_custom_call.1} parent=5 // pred_check
        %p225 = pneg %p224
      $region38: #{tpu_custom_call.1} parent=5 // pred_check_branch
        %227 = sbr.rel (%p225) target = $region40
      $region39: #{tpu_custom_call.1} parent=5 // pred_region
        // Predicated region
        $region41: #{tpu_custom_call.1} parent=39 // pred_check
          %p228 = pneg %p33
        $region42: #{tpu_custom_call.1} parent=39 // pred_check_branch
          %230 = sbr.rel (%p228) target = $region44
        $region43: #{tpu_custom_call.1} parent=39 // pred_region
          %s231 = smul.u32 32, %s13
          %s232 = ssub.s32 63, %s231
          %p233 = scmp.lt.s32.totalorder %s232, 32
          %s234 = scalar_select %p233, %s232, 32
          %s235 = smul.u32 128, %s234
          %p236 = scmp.lt.s32.totalorder %s231, 62
          %s237 = scalar_select %p236, %s231, 62
          %s238 = smul.addr %s237, 8
          %s239 = scalar_lea.vmem %s0, %s238
          %s240 = smul.u32 32, %s13
          %s241 = ssub.s32 63, %s240
          %p242 = scmp.lt.s32.totalorder %s241, 32
          %s243 = scalar_select %p242, %s241, 32
          %s244 = smul.u32 128, %s243
        $region44: #{tpu_custom_call.1} parent=39 // pred_fallthru
          _
      $region40: #{tpu_custom_call.1} parent=5 // pred_fallthru
        _
      %p245 = scmp.le.s32.totalorder 1, %s13
      %p246 = scmp.lt.s32.totalorder %s13, 3
      %p247 = pnand %p245, %p246
      %p248 = pneg %p247
      // Predicated region
      $region45: #{tpu_custom_call.1} parent=5 // pred_check
        _
      $region46: #{tpu_custom_call.1} parent=5 // pred_check_branch
        %250 = sbr.rel (%p247) target = $region48
      $region47: #{tpu_custom_call.1} parent=5 // pred_region
        %s251 = ssub.s32 %s13, 1
        %s252 = smul.u32 32, %s18
        %s253 = ssub.s32 63, %s252
        %p254 = scmp.lt.s32.totalorder %s253, 32
        %s255 = scalar_select %p254, %s253, 32
        %s256 = smul.u32 128, %s255
        %p257 = scmp.lt.s32.totalorder %s252, 62
        %s258 = scalar_select %p257, %s252, 62
        %s259 = smul.addr %s258, 8
        %s260 = scalar_lea.vmem %s0, %s259
        %p261 = pneg %p39
        %p262 = pneg %p36
        %p263 = pneg %p60
        %p264 = pneg %p57
        %p265 = pneg %p81
        %p266 = pneg %p78
        %p267 = pneg %p102
        %p268 = pneg %p99
        %p269 = pneg %p123
        %p270 = pneg %p120
        %p271 = pneg %p144
        %p272 = pneg %p141
        %p273 = pneg %p165
        %p274 = pneg %p162
        %p275 = pneg %p191
        %p276 = pneg %p188
        %s277 = sand.u32 %s178, 1
        %s278 = sand.u32 %s178, 1
        %s279 = smul.addr %s278, 256
        %s280 = scalar_lea.vmem [#allocation2], %s279
        %s281 = smul.u32 32, %s18
        %s282 = ssub.s32 63, %s281
        %p283 = scmp.lt.s32.totalorder %s282, 32
        %s284 = scalar_select %p283, %s282, 32
        %s285 = smul.u32 128, %s284
        %p286 = scmp.lt.s32.totalorder %s281, 62
        %s287 = scalar_select %p286, %s281, 62
        %s288 = smul.addr %s287, 8
        %s289 = scalar_lea.vmem %s0, %s288
        %s290 = smul.u32 32, %s18
        %s291 = ssub.s32 63, %s290
        %p292 = scmp.lt.s32.totalorder %s291, 32
        %s293 = scalar_select %p292, %s291, 32
        %s294 = smul.u32 128, %s293
        %s295 = smul.u32 32, %s18
        %s296 = ssub.s32 63, %s295
        %p297 = scmp.lt.s32.totalorder %s296, 32
        %s298 = scalar_select %p297, %s296, 32
        %s299 = smul.u32 128, %s298
        %v301 = vld [vmem:[%s289] sm:$0xff]
        %v302 = vld [vmem:[%s289 + $0x8] sm:$0xff]
        %v303 = vld [vmem:[%s289 + $0x10] sm:$0xff]
        %v304 = vld [vmem:[%s289 + $0x18] sm:$0xff]
        %v305 = vld [vmem:[%s289 + $0x20] sm:$0xff]
        %v306 = vld [vmem:[%s289 + $0x28] sm:$0xff]
        %v307 = vld [vmem:[%s289 + $0x30] sm:$0xff]
        %v308 = vld [vmem:[%s289 + $0x38] sm:$0xff]
        %v309 = vld [vmem:[%s289 + $0x40] sm:$0xff]
        %v310 = vld [vmem:[%s289 + $0x48] sm:$0xff]
        %v311 = vld [vmem:[%s289 + $0x50] sm:$0xff]
        %v312 = vld [vmem:[%s289 + $0x58] sm:$0xff]
        %v313 = vld [vmem:[%s289 + $0x60] sm:$0xff]
        %v314 = vld [vmem:[%s289 + $0x68] sm:$0xff]
        %v315 = vld [vmem:[%s289 + $0x70] sm:$0xff]
        %v316 = vld [vmem:[%s289 + $0x78] sm:$0xff]
        %v317 = vld [vmem:[%s289 + $0x80] sm:$0xff]
        %v318 = vld [vmem:[%s289 + $0x88] sm:$0xff]
        %v319 = vld [vmem:[%s289 + $0x90] sm:$0xff]
        %v320 = vld [vmem:[%s289 + $0x98] sm:$0xff]
        %v321 = vld [vmem:[%s289 + $0xa0] sm:$0xff]
        %v322 = vld [vmem:[%s289 + $0xa8] sm:$0xff]
        %v323 = vld [vmem:[%s289 + $0xb0] sm:$0xff]
        %v324 = vld [vmem:[%s289 + $0xb8] sm:$0xff]
        %v325 = vld [vmem:[%s289 + $0xc0] sm:$0xff]
        %v326 = vld [vmem:[%s289 + $0xc8] sm:$0xff]
        %v327 = vld [vmem:[%s289 + $0xd0] sm:$0xff]
        %v328 = vld [vmem:[%s289 + $0xd8] sm:$0xff]
        %v329 = vld [vmem:[%s289 + $0xe0] sm:$0xff]
        %v330 = vld [vmem:[%s289 + $0xe8] sm:$0xff]
        %v331 = vld [vmem:[%s289 + $0xf0] sm:$0xff]
        %v332 = vld [vmem:[%s289 + $0xf8] sm:$0xff]
        %v333 = vld [vmem:[%s1] sm:$0x3]
        %v334 = vld [vmem:[%s2] sm:$0x1]
        %v335 = vpack.c.bf16 %v302, %v301
        %v336 = vpack.c.bf16 %v304, %v303
        %v337 = vpack.c.bf16 %v306, %v305
        %v338 = vpack.c.bf16 %v308, %v307
        %v339 = vpack.c.bf16 %v310, %v309
        %v340 = vpack.c.bf16 %v312, %v311
        %v341 = vpack.c.bf16 %v314, %v313
        %v342 = vpack.c.bf16 %v316, %v315
        %v343 = vpack.c.bf16 %v318, %v317
        %v344 = vpack.c.bf16 %v320, %v319
        %v345 = vpack.c.bf16 %v322, %v321
        %v346 = vpack.c.bf16 %v324, %v323
        %v347 = vpack.c.bf16 %v326, %v325
        %v348 = vpack.c.bf16 %v328, %v327
        %v349 = vpack.c.bf16 %v330, %v329
        %v350 = vpack.c.bf16 %v332, %v331
        %v352 = vlaneseq
        %v353 = vshrl.u32 %v352, 7
        %v354 = vsub.s32 0, %v353
        %v355 = vrot.slane %v334, %v354
        %vm357 = vcmask 31744
        %v359 = vsel %vm357, %v335, 0
        %v362 = vsel %vm357, %v336, 0
        %v365 = vsel %vm357, %v337, 0
        %v368 = vsel %vm357, %v338, 0
        %v371 = vsel %vm357, %v339, 0
        %v374 = vsel %vm357, %v340, 0
        %v377 = vsel %vm357, %v341, 0
        %v380 = vsel %vm357, %v342, 0
        %v383 = vsel %vm357, %v343, 0
        %v386 = vsel %vm357, %v344, 0
        %v389 = vsel %vm357, %v345, 0
        %v392 = vsel %vm357, %v346, 0
        %v395 = vsel %vm357, %v347, 0
        %v398 = vsel %vm357, %v348, 0
        %v401 = vsel %vm357, %v349, 0
        %v404 = vsel %vm357, %v350, 0
        %vm406 = vcmask 1041408
        %v408 = vsel %vm406, %v333, 0
        %410 = vmatprep.subr.bf16.mxu0 0
        %411 = vmatpush1.bf16.msra.mxu0 %v408
        %412 = vmatprep.subr.bf16.mxu0 0
        %413 = vmatpush1.bf16.msra.mxu0 0
        %414 = vmatprep.subr.bf16.mxu0 0
        %415 = vmatpush1.bf16.msra.mxu0 0
        %416 = vmatprep.subr.bf16.mxu0 0
        %417 = vmatpush1.bf16.msra.mxu0 0
        %418 = vmatprep.subr.bf16.mxu0 0
        %419 = vmatpush1.bf16.msra.mxu0 0
        %420 = vmatprep.subr.bf16.mxu0 0
        %421 = vmatpush1.bf16.msra.mxu0 0
        %422 = vmatprep.subr.bf16.mxu0 0
        %423 = vmatpush1.bf16.msra.mxu0 0
        %424 = vmatprep.subr.bf16.mxu0 0
        %425 = vmatpush1.bf16.msra.mxu0 0
        %426 = vmatprep.subr.bf16.mxu0 0
        %427 = vmatpush1.bf16.msra.mxu0 0
        %428 = vmatprep.subr.bf16.mxu0 0
        %429 = vmatpush1.bf16.msra.mxu0 0
        %430 = vmatprep.subr.bf16.mxu0 0
        %431 = vmatpush1.bf16.msra.mxu0 0
        %432 = vmatprep.subr.bf16.mxu0 0
        %433 = vmatpush1.bf16.msra.mxu0 0
        %434 = vmatprep.subr.bf16.mxu0 0
        %435 = vmatpush1.bf16.msra.mxu0 0
        %436 = vmatprep.subr.bf16.mxu0 0
        %437 = vmatpush1.bf16.msra.mxu0 0
        %438 = vmatprep.subr.bf16.mxu0 0
        %439 = vmatpush1.bf16.msra.mxu0 0
        %440 = vmatprep.subr.bf16.mxu0 0
        %441 = vmatpush1.bf16.msra.mxu0 0
        %442 = vmatprep.mubr.bf16.mxu0 0
        %443 = vmatmul.mubr.bf16.gmra.mrb[0].mxu0 %v359
        %v444 = vpop.f32.mrb[0].mxu0
        %v445 = vadd.f32 %v355, %v444
        %v446 = vpop.f32.mrb[0].mxu0
        %v447 = vpop.f32.mrb[0].mxu0
        %v448 = vadd.f32 %v355, %v447
        %v449 = vpop.f32.mrb[0].mxu0
        %450 = vmatprep.mubr.bf16.mxu0 0
        %451 = vmatmul.mubr.bf16.gmra.mrb[0].mxu0 %v362
        %v452 = vpop.f32.mrb[0].mxu0
        %v453 = vadd.f32 %v355, %v452
        %v454 = vpop.f32.mrb[0].mxu0
        %v455 = vpop.f32.mrb[0].mxu0
        %v456 = vadd.f32 %v355, %v455
        %v457 = vpop.f32.mrb[0].mxu0
        %458 = vmatprep.mubr.bf16.mxu0 0
        %459 = vmatmul.mubr.bf16.gmra.mrb[0].mxu0 %v365
        %v460 = vpop.f32.mrb[0].mxu0
        %v461 = vadd.f32 %v355, %v460
        %v462 = vpop.f32.mrb[0].mxu0
        %v463 = vpop.f32.mrb[0].mxu0
        %v464 = vadd.f32 %v355, %v463
        %v465 = vpop.f32.mrb[0].mxu0
        %466 = vmatprep.mubr.bf16.mxu0 0
        %467 = vmatmul.mubr.bf16.gmra.mrb[0].mxu0 %v368
        %v468 = vpop.f32.mrb[0].mxu0
        %v469 = vadd.f32 %v355, %v468
        %v470 = vpop.f32.mrb[0].mxu0
        %v471 = vpop.f32.mrb[0].mxu0
        %v472 = vadd.f32 %v355, %v471
        %v473 = vpop.f32.mrb[0].mxu0
        %474 = vmatprep.mubr.bf16.mxu0 0
        %475 = vmatmul.mubr.bf16.gmra.mrb[0].mxu0 %v371
        %v476 = vpop.f32.mrb[0].mxu0
        %v477 = vadd.f32 %v355, %v476
        %v478 = vpop.f32.mrb[0].mxu0
        %v479 = vpop.f32.mrb[0].mxu0
        %v480 = vadd.f32 %v355, %v479
        %v481 = vpop.f32.mrb[0].mxu0
        %482 = vmatprep.mubr.bf16.mxu0 0
        %483 = vmatmul.mubr.bf16.gmra.mrb[0].mxu0 %v374
        %v484 = vpop.f32.mrb[0].mxu0
        %v485 = vadd.f32 %v355, %v484
        %v486 = vpop.f32.mrb[0].mxu0
        %v487 = vpop.f32.mrb[0].mxu0
        %v488 = vadd.f32 %v355, %v487
        %v489 = vpop.f32.mrb[0].mxu0
        %490 = vmatprep.mubr.bf16.mxu0 0
        %491 = vmatmul.mubr.bf16.gmra.mrb[0].mxu0 %v377
        %v492 = vpop.f32.mrb[0].mxu0
        %v493 = vadd.f32 %v355, %v492
        %v494 = vpop.f32.mrb[0].mxu0
        %v495 = vpop.f32.mrb[0].mxu0
        %v496 = vadd.f32 %v355, %v495
        %v497 = vpop.f32.mrb[0].mxu0
        %498 = vmatprep.mubr.bf16.mxu0 0
        %499 = vmatmul.mubr.bf16.gmra.mrb[0].mxu0 %v380
        %v500 = vpop.f32.mrb[0].mxu0
        %v501 = vadd.f32 %v355, %v500
        %v502 = vpop.f32.mrb[0].mxu0
        %v503 = vpop.f32.mrb[0].mxu0
        %v504 = vadd.f32 %v355, %v503
        %v505 = vpop.f32.mrb[0].mxu0
        %506 = vmatprep.mubr.bf16.mxu0 0
        %507 = vmatmul.mubr.bf16.gmra.mrb[0].mxu0 %v383
        %v508 = vpop.f32.mrb[0].mxu0
        %v509 = vadd.f32 %v355, %v508
        %v510 = vpop.f32.mrb[0].mxu0
        %v511 = vpop.f32.mrb[0].mxu0
        %v512 = vadd.f32 %v355, %v511
        %v513 = vpop.f32.mrb[0].mxu0
        %514 = vmatprep.mubr.bf16.mxu0 0
        %515 = vmatmul.mubr.bf16.gmra.mrb[0].mxu0 %v386
        %v516 = vpop.f32.mrb[0].mxu0
        %v517 = vadd.f32 %v355, %v516
        %v518 = vpop.f32.mrb[0].mxu0
        %v519 = vpop.f32.mrb[0].mxu0
        %v520 = vadd.f32 %v355, %v519
        %v521 = vpop.f32.mrb[0].mxu0
        %522 = vmatprep.mubr.bf16.mxu0 0
        %523 = vmatmul.mubr.bf16.gmra.mrb[0].mxu0 %v389
        %v524 = vpop.f32.mrb[0].mxu0
        %v525 = vadd.f32 %v355, %v524
        %v526 = vpop.f32.mrb[0].mxu0
        %v527 = vpop.f32.mrb[0].mxu0
        %v528 = vadd.f32 %v355, %v527
        %v529 = vpop.f32.mrb[0].mxu0
        %530 = vmatprep.mubr.bf16.mxu0 0
        %531 = vmatmul.mubr.bf16.gmra.mrb[0].mxu0 %v392
        %v532 = vpop.f32.mrb[0].mxu0
        %v533 = vadd.f32 %v355, %v532
        %v534 = vpop.f32.mrb[0].mxu0
        %v535 = vpop.f32.mrb[0].mxu0
        %v536 = vadd.f32 %v355, %v535
        %v537 = vpop.f32.mrb[0].mxu0
        %538 = vmatprep.mubr.bf16.mxu0 0
        %539 = vmatmul.mubr.bf16.gmra.mrb[0].mxu0 %v395
        %v540 = vpop.f32.mrb[0].mxu0
        %v541 = vadd.f32 %v355, %v540
        %v542 = vpop.f32.mrb[0].mxu0
        %v543 = vpop.f32.mrb[0].mxu0
        %v544 = vadd.f32 %v355, %v543
        %v545 = vpop.f32.mrb[0].mxu0
        %546 = vmatprep.mubr.bf16.mxu0 0
        %547 = vmatmul.mubr.bf16.gmra.mrb[0].mxu0 %v398
        %v548 = vpop.f32.mrb[0].mxu0
        %v549 = vadd.f32 %v355, %v548
        %v550 = vpop.f32.mrb[0].mxu0
        %v551 = vpop.f32.mrb[0].mxu0
        %v552 = vadd.f32 %v355, %v551
        %v553 = vpop.f32.mrb[0].mxu0
        %554 = vmatprep.mubr.bf16.mxu0 0
        %555 = vmatmul.mubr.bf16.gmra.mrb[0].mxu0 %v401
        %v556 = vpop.f32.mrb[0].mxu0
        %v557 = vadd.f32 %v355, %v556
        %v558 = vpop.f32.mrb[0].mxu0
        %v559 = vpop.f32.mrb[0].mxu0
        %v560 = vadd.f32 %v355, %v559
        %v561 = vpop.f32.mrb[0].mxu0
        %562 = vmatprep.mubr.bf16.mxu0 0
        %563 = vmatmul.mubr.bf16.gmra.mrb[0].mxu0 %v404
        %v564 = vpop.f32.mrb[0].mxu0
        %v565 = vadd.f32 %v355, %v564
        %v566 = vpop.f32.mrb[0].mxu0
        %v567 = vpop.f32.mrb[0].mxu0
        %v568 = vadd.f32 %v355, %v567
        %v569 = vpop.f32.mrb[0].mxu0
        %570 = vdwg.mxu0
        %v571 = vmax.f32 %v445, 0.0
        %v572 = vmax.f32 %v448, 0.0
        %v573 = vmax.f32 %v453, 0.0
        %v574 = vmax.f32 %v456, 0.0
        %v575 = vmax.f32 %v461, 0.0
        %v576 = vmax.f32 %v464, 0.0
        %v577 = vmax.f32 %v469, 0.0
        %v578 = vmax.f32 %v472, 0.0
        %v579 = vmax.f32 %v477, 0.0
        %v580 = vmax.f32 %v480, 0.0
        %v581 = vmax.f32 %v485, 0.0
        %v582 = vmax.f32 %v488, 0.0
        %v583 = vmax.f32 %v493, 0.0
        %v584 = vmax.f32 %v496, 0.0
        %v585 = vmax.f32 %v501, 0.0
        %v586 = vmax.f32 %v504, 0.0
        %v587 = vmax.f32 %v509, 0.0
        %v588 = vmax.f32 %v512, 0.0
        %v589 = vmax.f32 %v517, 0.0
        %v590 = vmax.f32 %v520, 0.0
        %v591 = vmax.f32 %v525, 0.0
        %v592 = vmax.f32 %v528, 0.0
        %v593 = vmax.f32 %v533, 0.0
        %v594 = vmax.f32 %v536, 0.0
        %v595 = vmax.f32 %v541, 0.0
        %v596 = vmax.f32 %v544, 0.0
        %v597 = vmax.f32 %v549, 0.0
        %v598 = vmax.f32 %v552, 0.0
        %v599 = vmax.f32 %v557, 0.0
        %v600 = vmax.f32 %v560, 0.0
        %v601 = vmax.f32 %v565, 0.0
        %v602 = vmax.f32 %v568, 0.0
        %v603 = vld [vmem:[%s3] sm:$0xf]
        %v604 = vld [vmem:[%s3 + $0x4] sm:$0xf]
        %v605 = vld [vmem:[%s3 + $0x8] sm:$0xf]
        %v606 = vld [vmem:[%s3 + $0xc] sm:$0xf]
        %v607 = vld [vmem:[%s4] sm:$0x1]
        %v608 = vpack.c.bf16 %v572, %v571
        %v609 = vpack.c.bf16 %v574, %v573
        %v610 = vpack.c.bf16 %v576, %v575
        %v611 = vpack.c.bf16 %v578, %v577
        %v612 = vpack.c.bf16 %v580, %v579
        %v613 = vpack.c.bf16 %v582, %v581
        %v614 = vpack.c.bf16 %v584, %v583
        %v615 = vpack.c.bf16 %v586, %v585
        %v616 = vpack.c.bf16 %v588, %v587
        %v617 = vpack.c.bf16 %v590, %v589
        %v618 = vpack.c.bf16 %v592, %v591
        %v619 = vpack.c.bf16 %v594, %v593
        %v620 = vpack.c.bf16 %v596, %v595
        %v621 = vpack.c.bf16 %v598, %v597
        %v622 = vpack.c.bf16 %v600, %v599
        %v623 = vpack.c.bf16 %v602, %v601
        %v625 = vlaneseq
        %v626 = vshrl.u32 %v625, 7
        %v627 = vsub.s32 0, %v626
        %v628 = vrot.slane %v607, %v627
        %v634 = vunpack.c.l.b16 %v603
        %v635 = vunpack.c.l.b16 %v604
        %v636 = vunpack.c.l.b16 %v605
        %v637 = vunpack.c.l.b16 %v606
        %v638 = vpack.c.b16 %v635, %v634
        %v639 = vpack.c.b16 %v637, %v636
        %vm642 = vcmask 261120
        %v644 = vsel %vm642, %v608, 0
        %v647 = vsel %vm642, %v609, 0
        %v650 = vsel %vm642, %v610, 0
        %v653 = vsel %vm642, %v611, 0
        %v656 = vsel %vm642, %v612, 0
        %v659 = vsel %vm642, %v613, 0
        %v662 = vsel %vm642, %v614, 0
        %v665 = vsel %vm642, %v615, 0
        %v668 = vsel %vm642, %v616, 0
        %v671 = vsel %vm642, %v617, 0
        %v674 = vsel %vm642, %v618, 0
        %v677 = vsel %vm642, %v619, 0
        %v680 = vsel %vm642, %v620, 0
        %v683 = vsel %vm642, %v621, 0
        %v686 = vsel %vm642, %v622, 0
        %v689 = vsel %vm642, %v623, 0
        %691 = vmatprep.subr.bf16.mxu0 0
        %692 = vmatpush1.bf16.msra.mxu0 %v638
        %693 = vmatprep.subr.bf16.mxu0 0
        %694 = vmatpush1.bf16.msra.mxu0 %v639
        %695 = vmatprep.subr.bf16.mxu0 0
        %696 = vmatpush1.bf16.msra.mxu0 0
        %697 = vmatprep.subr.bf16.mxu0 0
        %698 = vmatpush1.bf16.msra.mxu0 0
        %699 = vmatprep.subr.bf16.mxu0 0
        %700 = vmatpush1.bf16.msra.mxu0 0
        %701 = vmatprep.subr.bf16.mxu0 0
        %702 = vmatpush1.bf16.msra.mxu0 0
        %703 = vmatprep.subr.bf16.mxu0 0
        %704 = vmatpush1.bf16.msra.mxu0 0
        %705 = vmatprep.subr.bf16.mxu0 0
        %706 = vmatpush1.bf16.msra.mxu0 0
        %707 = vmatprep.subr.bf16.mxu0 0
        %708 = vmatpush1.bf16.msra.mxu0 0
        %709 = vmatprep.subr.bf16.mxu0 0
        %710 = vmatpush1.bf16.msra.mxu0 0
        %711 = vmatprep.subr.bf16.mxu0 0
        %712 = vmatpush1.bf16.msra.mxu0 0
        %713 = vmatprep.subr.bf16.mxu0 0
        %714 = vmatpush1.bf16.msra.mxu0 0
        %715 = vmatprep.subr.bf16.mxu0 0
        %716 = vmatpush1.bf16.msra.mxu0 0
        %717 = vmatprep.subr.bf16.mxu0 0
        %718 = vmatpush1.bf16.msra.mxu0 0
        %719 = vmatprep.subr.bf16.mxu0 0
        %720 = vmatpush1.bf16.msra.mxu0 0
        %721 = vmatprep.subr.bf16.mxu0 0
        %722 = vmatpush1.bf16.msra.mxu0 0
        %723 = vmatprep.mubr.bf16.mxu0 0
        %724 = vmatmul.mubr.bf16.gmra.mrb[0].mxu0 %v644
        %v725 = vpop.f32.mrb[0].mxu0
        %v726 = vadd.f32 %v628, %v725
        %v727 = vpop.f32.mrb[0].mxu0
        %v728 = vpop.f32.mrb[0].mxu0
        %v729 = vadd.f32 %v628, %v728
        %v730 = vpop.f32.mrb[0].mxu0
        %731 = vmatprep.mubr.bf16.mxu0 0
        %732 = vmatmul.mubr.bf16.gmra.mrb[0].mxu0 %v647
        %v733 = vpop.f32.mrb[0].mxu0
        %v734 = vadd.f32 %v628, %v733
        %v735 = vpop.f32.mrb[0].mxu0
        %v736 = vpop.f32.mrb[0].mxu0
        %v737 = vadd.f32 %v628, %v736
        %v738 = vpop.f32.mrb[0].mxu0
        %739 = vmatprep.mubr.bf16.mxu0 0
        %740 = vmatmul.mubr.bf16.gmra.mrb[0].mxu0 %v650
        %v741 = vpop.f32.mrb[0].mxu0
        %v742 = vadd.f32 %v628, %v741
        %v743 = vpop.f32.mrb[0].mxu0
        %v744 = vpop.f32.mrb[0].mxu0
        %v745 = vadd.f32 %v628, %v744
        %v746 = vpop.f32.mrb[0].mxu0
        %747 = vmatprep.mubr.bf16.mxu0 0
        %748 = vmatmul.mubr.bf16.gmra.mrb[0].mxu0 %v653
        %v749 = vpop.f32.mrb[0].mxu0
        %v750 = vadd.f32 %v628, %v749
        %v751 = vpop.f32.mrb[0].mxu0
        %v752 = vpop.f32.mrb[0].mxu0
        %v753 = vadd.f32 %v628, %v752
        %v754 = vpop.f32.mrb[0].mxu0
        %755 = vmatprep.mubr.bf16.mxu0 0
        %756 = vmatmul.mubr.bf16.gmra.mrb[0].mxu0 %v656
        %v757 = vpop.f32.mrb[0].mxu0
        %v758 = vadd.f32 %v628, %v757
        %v759 = vpop.f32.mrb[0].mxu0
        %v760 = vpop.f32.mrb[0].mxu0
        %v761 = vadd.f32 %v628, %v760
        %v762 = vpop.f32.mrb[0].mxu0
        %763 = vmatprep.mubr.bf16.mxu0 0
        %764 = vmatmul.mubr.bf16.gmra.mrb[0].mxu0 %v659
        %v765 = vpop.f32.mrb[0].mxu0
        %v766 = vadd.f32 %v628, %v765
        %v767 = vpop.f32.mrb[0].mxu0
        %v768 = vpop.f32.mrb[0].mxu0
        %v769 = vadd.f32 %v628, %v768
        %v770 = vpop.f32.mrb[0].mxu0
        %771 = vmatprep.mubr.bf16.mxu0 0
        %772 = vmatmul.mubr.bf16.gmra.mrb[0].mxu0 %v662
        %v773 = vpop.f32.mrb[0].mxu0
        %v774 = vadd.f32 %v628, %v773
        %v775 = vpop.f32.mrb[0].mxu0
        %v776 = vpop.f32.mrb[0].mxu0
        %v777 = vadd.f32 %v628, %v776
        %v778 = vpop.f32.mrb[0].mxu0
        %779 = vmatprep.mubr.bf16.mxu0 0
        %780 = vmatmul.mubr.bf16.gmra.mrb[0].mxu0 %v665
        %v781 = vpop.f32.mrb[0].mxu0
        %v782 = vadd.f32 %v628, %v781
        %v783 = vpop.f32.mrb[0].mxu0
        %v784 = vpop.f32.mrb[0].mxu0
        %v785 = vadd.f32 %v628, %v784
        %v786 = vpop.f32.mrb[0].mxu0
        %787 = vmatprep.mubr.bf16.mxu0 0
        %788 = vmatmul.mubr.bf16.gmra.mrb[0].mxu0 %v668
        %v789 = vpop.f32.mrb[0].mxu0
        %v790 = vadd.f32 %v628, %v789
        %v791 = vpop.f32.mrb[0].mxu0
        %v792 = vpop.f32.mrb[0].mxu0
        %v793 = vadd.f32 %v628, %v792
        %v794 = vpop.f32.mrb[0].mxu0
        %795 = vmatprep.mubr.bf16.mxu0 0
        %796 = vmatmul.mubr.bf16.gmra.mrb[0].mxu0 %v671
        %v797 = vpop.f32.mrb[0].mxu0
        %v798 = vadd.f32 %v628, %v797
        %v799 = vpop.f32.mrb[0].mxu0
        %v800 = vpop.f32.mrb[0].mxu0
        %v801 = vadd.f32 %v628, %v800
        %v802 = vpop.f32.mrb[0].mxu0
        %803 = vmatprep.mubr.bf16.mxu0 0
        %804 = vmatmul.mubr.bf16.gmra.mrb[0].mxu0 %v674
        %v805 = vpop.f32.mrb[0].mxu0
        %v806 = vadd.f32 %v628, %v805
        %v807 = vpop.f32.mrb[0].mxu0
        %v808 = vpop.f32.mrb[0].mxu0
        %v809 = vadd.f32 %v628, %v808
        %v810 = vpop.f32.mrb[0].mxu0
        %811 = vmatprep.mubr.bf16.mxu0 0
        %812 = vmatmul.mubr.bf16.gmra.mrb[0].mxu0 %v677
        %v813 = vpop.f32.mrb[0].mxu0
        %v814 = vadd.f32 %v628, %v813
        %v815 = vpop.f32.mrb[0].mxu0
        %v816 = vpop.f32.mrb[0].mxu0
        %v817 = vadd.f32 %v628, %v816
        %v818 = vpop.f32.mrb[0].mxu0
        %819 = vmatprep.mubr.bf16.mxu0 0
        %820 = vmatmul.mubr.bf16.gmra.mrb[0].mxu0 %v680
        %v821 = vpop.f32.mrb[0].mxu0
        %v822 = vadd.f32 %v628, %v821
        %v823 = vpop.f32.mrb[0].mxu0
        %v824 = vpop.f32.mrb[0].mxu0
        %v825 = vadd.f32 %v628, %v824
        %v826 = vpop.f32.mrb[0].mxu0
        %827 = vmatprep.mubr.bf16.mxu0 0
        %828 = vmatmul.mubr.bf16.gmra.mrb[0].mxu0 %v683
        %v829 = vpop.f32.mrb[0].mxu0
        %v830 = vadd.f32 %v628, %v829
        %v831 = vpop.f32.mrb[0].mxu0
        %v832 = vpop.f32.mrb[0].mxu0
        %v833 = vadd.f32 %v628, %v832
        %v834 = vpop.f32.mrb[0].mxu0
        %835 = vmatprep.mubr.bf16.mxu0 0
        %836 = vmatmul.mubr.bf16.gmra.mrb[0].mxu0 %v686
        %v837 = vpop.f32.mrb[0].mxu0
        %v838 = vadd.f32 %v628, %v837
        %v839 = vpop.f32.mrb[0].mxu0
        %v840 = vpop.f32.mrb[0].mxu0
        %v841 = vadd.f32 %v628, %v840
        %v842 = vpop.f32.mrb[0].mxu0
        %843 = vmatprep.mubr.bf16.mxu0 0
        %844 = vmatmul.mubr.bf16.gmra.mrb[0].mxu0 %v689
        %v845 = vpop.f32.mrb[0].mxu0
        %v846 = vadd.f32 %v628, %v845
        %v847 = vpop.f32.mrb[0].mxu0
        %v848 = vpop.f32.mrb[0].mxu0
        %v849 = vadd.f32 %v628, %v848
        %v850 = vpop.f32.mrb[0].mxu0
        %851 = vdwg.mxu0
        %v852 = vtanh.pop %v726
        %v853 = vtanh.pop %v729
        %v854 = vtanh.pop %v734
        %v855 = vtanh.pop %v737
        %v856 = vtanh.pop %v742
        %v857 = vtanh.pop %v745
        %v858 = vtanh.pop %v750
        %v859 = vtanh.pop %v753
        %v860 = vtanh.pop %v758
        %v861 = vtanh.pop %v761
        %v862 = vtanh.pop %v766
        %v863 = vtanh.pop %v769
        %v864 = vtanh.pop %v774
        %v865 = vtanh.pop %v777
        %v866 = vtanh.pop %v782
        %v867 = vtanh.pop %v785
        %v868 = vtanh.pop %v790
        %v869 = vtanh.pop %v793
        %v870 = vtanh.pop %v798
        %v871 = vtanh.pop %v801
        %v872 = vtanh.pop %v806
        %v873 = vtanh.pop %v809
        %v874 = vtanh.pop %v814
        %v875 = vtanh.pop %v817
        %v876 = vtanh.pop %v822
        %v877 = vtanh.pop %v825
        %v878 = vtanh.pop %v830
        %v879 = vtanh.pop %v833
        %v880 = vtanh.pop %v838
        %v881 = vtanh.pop %v841
        %v882 = vtanh.pop %v846
        %v883 = vtanh.pop %v849
        %v884 = vld [vmem:[%s5] sm:$0xf]
        %v885 = vld [vmem:[%s5 + $0x4] sm:$0xf]
        %v886 = vld [vmem:[%s5 + $0x8] sm:$0xf]
        %v887 = vld [vmem:[%s5 + $0xc] sm:$0xf]
        %v888 = vld [vmem:[%s6] sm:$0x1]
        %v889 = vpack.c.bf16 %v853, %v852
        %v890 = vpack.c.bf16 %v855, %v854
        %v891 = vpack.c.bf16 %v857, %v856
        %v892 = vpack.c.bf16 %v859, %v858
        %v893 = vpack.c.bf16 %v861, %v860
        %v894 = vpack.c.bf16 %v863, %v862
        %v895 = vpack.c.bf16 %v865, %v864
        %v896 = vpack.c.bf16 %v867, %v866
        %v897 = vpack.c.bf16 %v869, %v868
        %v898 = vpack.c.bf16 %v871, %v870
        %v899 = vpack.c.bf16 %v873, %v872
        %v900 = vpack.c.bf16 %v875, %v874
        %v901 = vpack.c.bf16 %v877, %v876
        %v902 = vpack.c.bf16 %v879, %v878
        %v903 = vpack.c.bf16 %v881, %v880
        %v904 = vpack.c.bf16 %v883, %v882
        %v906 = vlaneseq
        %v907 = vshrl.u32 %v906, 7
        %v908 = vsub.s32 0, %v907
        %v909 = vrot.slane %v888, %v908
        %v915 = vunpack.c.l.b16 %v884
        %v916 = vunpack.c.l.b16 %v885
        %v917 = vunpack.c.l.b16 %v886
        %v918 = vunpack.c.l.b16 %v887
        %v919 = vpack.c.b16 %v916, %v915
        %v920 = vpack.c.b16 %v918, %v917
        %v924 = vsel %vm642, %v889, 0
        %v927 = vsel %vm642, %v890, 0
        %v930 = vsel %vm642, %v891, 0
        %v933 = vsel %vm642, %v892, 0
        %v936 = vsel %vm642, %v893, 0
        %v939 = vsel %vm642, %v894, 0
        %v942 = vsel %vm642, %v895, 0
        %v945 = vsel %vm642, %v896, 0
        %v948 = vsel %vm642, %v897, 0
        %v951 = vsel %vm642, %v898, 0
        %v954 = vsel %vm642, %v899, 0
        %v957 = vsel %vm642, %v900, 0
        %v960 = vsel %vm642, %v901, 0
        %v963 = vsel %vm642, %v902, 0
        %v966 = vsel %vm642, %v903, 0
        %v969 = vsel %vm642, %v904, 0
        %971 = vmatprep.subr.bf16.mxu0 0
        %972 = vmatpush1.bf16.msra.mxu0 %v919
        %973 = vmatprep.subr.bf16.mxu0 0
        %974 = vmatpush1.bf16.msra.mxu0 %v920
        %975 = vmatprep.subr.bf16.mxu0 0
        %976 = vmatpush1.bf16.msra.mxu0 0
        %977 = vmatprep.subr.bf16.mxu0 0
        %978 = vmatpush1.bf16.msra.mxu0 0
        %979 = vmatprep.subr.bf16.mxu0 0
        %980 = vmatpush1.bf16.msra.mxu0 0
        %981 = vmatprep.subr.bf16.mxu0 0
        %982 = vmatpush1.bf16.msra.mxu0 0
        %983 = vmatprep.subr.bf16.mxu0 0
        %984 = vmatpush1.bf16.msra.mxu0 0
        %985 = vmatprep.subr.bf16.mxu0 0
        %986 = vmatpush1.bf16.msra.mxu0 0
        %987 = vmatprep.subr.bf16.mxu0 0
        %988 = vmatpush1.bf16.msra.mxu0 0
        %989 = vmatprep.subr.bf16.mxu0 0
        %990 = vmatpush1.bf16.msra.mxu0 0
        %991 = vmatprep.subr.bf16.mxu0 0
        %992 = vmatpush1.bf16.msra.mxu0 0
        %993 = vmatprep.subr.bf16.mxu0 0
        %994 = vmatpush1.bf16.msra.mxu0 0
        %995 = vmatprep.subr.bf16.mxu0 0
        %996 = vmatpush1.bf16.msra.mxu0 0
        %997 = vmatprep.subr.bf16.mxu0 0
        %998 = vmatpush1.bf16.msra.mxu0 0
        %999 = vmatprep.subr.bf16.mxu0 0
        %1000 = vmatpush1.bf16.msra.mxu0 0
        %1001 = vmatprep.subr.bf16.mxu0 0
        %1002 = vmatpush1.bf16.msra.mxu0 0
        %1003 = vmatprep.mubr.bf16.mxu0 0
        %1004 = vmatmul.mubr.bf16.gmra.mrb[0].mxu0 %v924
        %v1005 = vpop.f32.mrb[0].mxu0
        %v1006 = vadd.f32 %v909, %v1005
        %v1007 = vpop.f32.mrb[0].mxu0
        %v1008 = vpop.f32.mrb[0].mxu0
        %v1009 = vadd.f32 %v909, %v1008
        %v1010 = vpop.f32.mrb[0].mxu0
        %1011 = vmatprep.mubr.bf16.mxu0 0
        %1012 = vmatmul.mubr.bf16.gmra.mrb[0].mxu0 %v927
        %v1013 = vpop.f32.mrb[0].mxu0
        %v1014 = vadd.f32 %v909, %v1013
        %v1015 = vpop.f32.mrb[0].mxu0
        %v1016 = vpop.f32.mrb[0].mxu0
        %v1017 = vadd.f32 %v909, %v1016
        %v1018 = vpop.f32.mrb[0].mxu0
        %1019 = vmatprep.mubr.bf16.mxu0 0
        %1020 = vmatmul.mubr.bf16.gmra.mrb[0].mxu0 %v930
        %v1021 = vpop.f32.mrb[0].mxu0
        %v1022 = vadd.f32 %v909, %v1021
        %v1023 = vpop.f32.mrb[0].mxu0
        %v1024 = vpop.f32.mrb[0].mxu0
        %v1025 = vadd.f32 %v909, %v1024
        %v1026 = vpop.f32.mrb[0].mxu0
        %1027 = vmatprep.mubr.bf16.mxu0 0
        %1028 = vmatmul.mubr.bf16.gmra.mrb[0].mxu0 %v933
        %v1029 = vpop.f32.mrb[0].mxu0
        %v1030 = vadd.f32 %v909, %v1029
        %v1031 = vpop.f32.mrb[0].mxu0
        %v1032 = vpop.f32.mrb[0].mxu0
        %v1033 = vadd.f32 %v909, %v1032
        %v1034 = vpop.f32.mrb[0].mxu0
        %1035 = vmatprep.mubr.bf16.mxu0 0
        %1036 = vmatmul.mubr.bf16.gmra.mrb[0].mxu0 %v936
        %v1037 = vpop.f32.mrb[0].mxu0
        %v1038 = vadd.f32 %v909, %v1037
        %v1039 = vpop.f32.mrb[0].mxu0
        %v1040 = vpop.f32.mrb[0].mxu0
        %v1041 = vadd.f32 %v909, %v1040
        %v1042 = vpop.f32.mrb[0].mxu0
        %1043 = vmatprep.mubr.bf16.mxu0 0
        %1044 = vmatmul.mubr.bf16.gmra.mrb[0].mxu0 %v939
        %v1045 = vpop.f32.mrb[0].mxu0
        %v1046 = vadd.f32 %v909, %v1045
        %v1047 = vpop.f32.mrb[0].mxu0
        %v1048 = vpop.f32.mrb[0].mxu0
        %v1049 = vadd.f32 %v909, %v1048
        %v1050 = vpop.f32.mrb[0].mxu0
        %1051 = vmatprep.mubr.bf16.mxu0 0
        %1052 = vmatmul.mubr.bf16.gmra.mrb[0].mxu0 %v942
        %v1053 = vpop.f32.mrb[0].mxu0
        %v1054 = vadd.f32 %v909, %v1053
        %v1055 = vpop.f32.mrb[0].mxu0
        %v1056 = vpop.f32.mrb[0].mxu0
        %v1057 = vadd.f32 %v909, %v1056
        %v1058 = vpop.f32.mrb[0].mxu0
        %1059 = vmatprep.mubr.bf16.mxu0 0
        %1060 = vmatmul.mubr.bf16.gmra.mrb[0].mxu0 %v945
        %v1061 = vpop.f32.mrb[0].mxu0
        %v1062 = vadd.f32 %v909, %v1061
        %v1063 = vpop.f32.mrb[0].mxu0
        %v1064 = vpop.f32.mrb[0].mxu0
        %v1065 = vadd.f32 %v909, %v1064
        %v1066 = vpop.f32.mrb[0].mxu0
        %1067 = vmatprep.mubr.bf16.mxu0 0
        %1068 = vmatmul.mubr.bf16.gmra.mrb[0].mxu0 %v948
        %v1069 = vpop.f32.mrb[0].mxu0
        %v1070 = vadd.f32 %v909, %v1069
        %v1071 = vpop.f32.mrb[0].mxu0
        %v1072 = vpop.f32.mrb[0].mxu0
        %v1073 = vadd.f32 %v909, %v1072
        %v1074 = vpop.f32.mrb[0].mxu0
        %1075 = vmatprep.mubr.bf16.mxu0 0
        %1076 = vmatmul.mubr.bf16.gmra.mrb[0].mxu0 %v951
        %v1077 = vpop.f32.mrb[0].mxu0
        %v1078 = vadd.f32 %v909, %v1077
        %v1079 = vpop.f32.mrb[0].mxu0
        %v1080 = vpop.f32.mrb[0].mxu0
        %v1081 = vadd.f32 %v909, %v1080
        %v1082 = vpop.f32.mrb[0].mxu0
        %1083 = vmatprep.mubr.bf16.mxu0 0
        %1084 = vmatmul.mubr.bf16.gmra.mrb[0].mxu0 %v954
        %v1085 = vpop.f32.mrb[0].mxu0
        %v1086 = vadd.f32 %v909, %v1085
        %v1087 = vpop.f32.mrb[0].mxu0
        %v1088 = vpop.f32.mrb[0].mxu0
        %v1089 = vadd.f32 %v909, %v1088
        %v1090 = vpop.f32.mrb[0].mxu0
        %1091 = vmatprep.mubr.bf16.mxu0 0
        %1092 = vmatmul.mubr.bf16.gmra.mrb[0].mxu0 %v957
        %v1093 = vpop.f32.mrb[0].mxu0
        %v1094 = vadd.f32 %v909, %v1093
        %v1095 = vpop.f32.mrb[0].mxu0
        %v1096 = vpop.f32.mrb[0].mxu0
        %v1097 = vadd.f32 %v909, %v1096
        %v1098 = vpop.f32.mrb[0].mxu0
        %1099 = vmatprep.mubr.bf16.mxu0 0
        %1100 = vmatmul.mubr.bf16.gmra.mrb[0].mxu0 %v960
        %v1101 = vpop.f32.mrb[0].mxu0
        %v1102 = vadd.f32 %v909, %v1101
        %v1103 = vpop.f32.mrb[0].mxu0
        %v1104 = vpop.f32.mrb[0].mxu0
        %v1105 = vadd.f32 %v909, %v1104
        %v1106 = vpop.f32.mrb[0].mxu0
        %1107 = vmatprep.mubr.bf16.mxu0 0
        %1108 = vmatmul.mubr.bf16.gmra.mrb[0].mxu0 %v963
        %v1109 = vpop.f32.mrb[0].mxu0
        %v1110 = vadd.f32 %v909, %v1109
        %v1111 = vpop.f32.mrb[0].mxu0
        %v1112 = vpop.f32.mrb[0].mxu0
        %v1113 = vadd.f32 %v909, %v1112
        %v1114 = vpop.f32.mrb[0].mxu0
        %1115 = vmatprep.mubr.bf16.mxu0 0
        %1116 = vmatmul.mubr.bf16.gmra.mrb[0].mxu0 %v966
        %v1117 = vpop.f32.mrb[0].mxu0
        %v1118 = vadd.f32 %v909, %v1117
        %v1119 = vpop.f32.mrb[0].mxu0
        %v1120 = vpop.f32.mrb[0].mxu0
        %v1121 = vadd.f32 %v909, %v1120
        %v1122 = vpop.f32.mrb[0].mxu0
        %1123 = vmatprep.mubr.bf16.mxu0 0
        %1124 = vmatmul.mubr.bf16.gmra.mrb[0].mxu0 %v969
        %v1125 = vpop.f32.mrb[0].mxu0
        %v1126 = vadd.f32 %v909, %v1125
        %v1127 = vpop.f32.mrb[0].mxu0
        %v1128 = vpop.f32.mrb[0].mxu0
        %v1129 = vadd.f32 %v909, %v1128
        %v1130 = vpop.f32.mrb[0].mxu0
        %1131 = vdwg.mxu0
        %v1132 = vsub.f32 0.0, %v1006
        %v1133 = vsub.f32 0.0, %v1009
        %v1134 = vsub.f32 0.0, %v1014
        %v1135 = vsub.f32 0.0, %v1017
        %v1136 = vsub.f32 0.0, %v1022
        %v1137 = vsub.f32 0.0, %v1025
        %v1138 = vsub.f32 0.0, %v1030
        %v1139 = vsub.f32 0.0, %v1033
        %v1140 = vsub.f32 0.0, %v1038
        %v1141 = vsub.f32 0.0, %v1041
        %v1142 = vsub.f32 0.0, %v1046
        %v1143 = vsub.f32 0.0, %v1049
        %v1144 = vsub.f32 0.0, %v1054
        %v1145 = vsub.f32 0.0, %v1057
        %v1146 = vsub.f32 0.0, %v1062
        %v1147 = vsub.f32 0.0, %v1065
        %v1148 = vsub.f32 0.0, %v1070
        %v1149 = vsub.f32 0.0, %v1073
        %v1150 = vsub.f32 0.0, %v1078
        %v1151 = vsub.f32 0.0, %v1081
        %v1152 = vsub.f32 0.0, %v1086
        %v1153 = vsub.f32 0.0, %v1089
        %v1154 = vsub.f32 0.0, %v1094
        %v1155 = vsub.f32 0.0, %v1097
        %v1156 = vsub.f32 0.0, %v1102
        %v1157 = vsub.f32 0.0, %v1105
        %v1158 = vsub.f32 0.0, %v1110
        %v1159 = vsub.f32 0.0, %v1113
        %v1160 = vsub.f32 0.0, %v1118
        %v1161 = vsub.f32 0.0, %v1121
        %v1162 = vsub.f32 0.0, %v1126
        %v1163 = vsub.f32 0.0, %v1129
        %v1164 = vmul.f32 %v1132, 1.442695
        %v1165 = vpow.pop %v1164
        %v1166 = vmul.f32 %v1133, 1.442695
        %v1167 = vpow.pop %v1166
        %v1168 = vmul.f32 %v1134, 1.442695
        %v1169 = vpow.pop %v1168
        %v1170 = vmul.f32 %v1135, 1.442695
        %v1171 = vpow.pop %v1170
        %v1172 = vmul.f32 %v1136, 1.442695
        %v1173 = vpow.pop %v1172
        %v1174 = vmul.f32 %v1137, 1.442695
        %v1175 = vpow.pop %v1174
        %v1176 = vmul.f32 %v1138, 1.442695
        %v1177 = vpow.pop %v1176
        %v1178 = vmul.f32 %v1139, 1.442695
        %v1179 = vpow.pop %v1178
        %v1180 = vmul.f32 %v1140, 1.442695
        %v1181 = vpow.pop %v1180
        %v1182 = vmul.f32 %v1141, 1.442695
        %v1183 = vpow.pop %v1182
        %v1184 = vmul.f32 %v1142, 1.442695
        %v1185 = vpow.pop %v1184
        %v1186 = vmul.f32 %v1143, 1.442695
        %v1187 = vpow.pop %v1186
        %v1188 = vmul.f32 %v1144, 1.442695
        %v1189 = vpow.pop %v1188
        %v1190 = vmul.f32 %v1145, 1.442695
        %v1191 = vpow.pop %v1190
        %v1192 = vmul.f32 %v1146, 1.442695
        %v1193 = vpow.pop %v1192
        %v1194 = vmul.f32 %v1147, 1.442695
        %v1195 = vpow.pop %v1194
        %v1196 = vmul.f32 %v1148, 1.442695
        %v1197 = vpow.pop %v1196
        %v1198 = vmul.f32 %v1149, 1.442695
        %v1199 = vpow.pop %v1198
        %v1200 = vmul.f32 %v1150, 1.442695
        %v1201 = vpow.pop %v1200
        %v1202 = vmul.f32 %v1151, 1.442695
        %v1203 = vpow.pop %v1202
        %v1204 = vmul.f32 %v1152, 1.442695
        %v1205 = vpow.pop %v1204
        %v1206 = vmul.f32 %v1153, 1.442695
        %v1207 = vpow.pop %v1206
        %v1208 = vmul.f32 %v1154, 1.442695
        %v1209 = vpow.pop %v1208
        %v1210 = vmul.f32 %v1155, 1.442695
        %v1211 = vpow.pop %v1210
        %v1212 = vmul.f32 %v1156, 1.442695
        %v1213 = vpow.pop %v1212
        %v1214 = vmul.f32 %v1157, 1.442695
        %v1215 = vpow.pop %v1214
        %v1216 = vmul.f32 %v1158, 1.442695
        %v1217 = vpow.pop %v1216
        %v1218 = vmul.f32 %v1159, 1.442695
        %v1219 = vpow.pop %v1218
        %v1220 = vmul.f32 %v1160, 1.442695
        %v1221 = vpow.pop %v1220
        %v1222 = vmul.f32 %v1161, 1.442695
        %v1223 = vpow.pop %v1222
        %v1224 = vmul.f32 %v1162, 1.442695
        %v1225 = vpow.pop %v1224
        %v1226 = vmul.f32 %v1163, 1.442695
        %v1227 = vpow.pop %v1226
        %v1228 = vadd.f32 %v1165, 1.0
        %v1229 = vadd.f32 %v1167, 1.0
        %v1230 = vadd.f32 %v1169, 1.0
        %v1231 = vadd.f32 %v1171, 1.0
        %v1232 = vadd.f32 %v1173, 1.0
        %v1233 = vadd.f32 %v1175, 1.0
        %v1234 = vadd.f32 %v1177, 1.0
        %v1235 = vadd.f32 %v1179, 1.0
        %v1236 = vadd.f32 %v1181, 1.0
        %v1237 = vadd.f32 %v1183, 1.0
        %v1238 = vadd.f32 %v1185, 1.0
        %v1239 = vadd.f32 %v1187, 1.0
        %v1240 = vadd.f32 %v1189, 1.0
        %v1241 = vadd.f32 %v1191, 1.0
        %v1242 = vadd.f32 %v1193, 1.0
        %v1243 = vadd.f32 %v1195, 1.0
        %v1244 = vadd.f32 %v1197, 1.0
        %v1245 = vadd.f32 %v1199, 1.0
        %v1246 = vadd.f32 %v1201, 1.0
        %v1247 = vadd.f32 %v1203, 1.0
        %v1248 = vadd.f32 %v1205, 1.0
        %v1249 = vadd.f32 %v1207, 1.0
        %v1250 = vadd.f32 %v1209, 1.0
        %v1251 = vadd.f32 %v1211, 1.0
        %v1252 = vadd.f32 %v1213, 1.0
        %v1253 = vadd.f32 %v1215, 1.0
        %v1254 = vadd.f32 %v1217, 1.0
        %v1255 = vadd.f32 %v1219, 1.0
        %v1256 = vadd.f32 %v1221, 1.0
        %v1257 = vadd.f32 %v1223, 1.0
        %v1258 = vadd.f32 %v1225, 1.0
        %v1259 = vadd.f32 %v1227, 1.0
        %v1260 = vrcp.pop %v1228
        %v1261 = vmul.f32 1.0, %v1260
        %v1262 = vrcp.pop %v1229
        %v1263 = vmul.f32 1.0, %v1262
        %v1264 = vrcp.pop %v1230
        %v1265 = vmul.f32 1.0, %v1264
        %v1266 = vrcp.pop %v1231
        %v1267 = vmul.f32 1.0, %v1266
        %v1268 = vrcp.pop %v1232
        %v1269 = vmul.f32 1.0, %v1268
        %v1270 = vrcp.pop %v1233
        %v1271 = vmul.f32 1.0, %v1270
        %v1272 = vrcp.pop %v1234
        %v1273 = vmul.f32 1.0, %v1272
        %v1274 = vrcp.pop %v1235
        %v1275 = vmul.f32 1.0, %v1274
        %v1276 = vrcp.pop %v1236
        %v1277 = vmul.f32 1.0, %v1276
        %v1278 = vrcp.pop %v1237
        %v1279 = vmul.f32 1.0, %v1278
        %v1280 = vrcp.pop %v1238
        %v1281 = vmul.f32 1.0, %v1280
        %v1282 = vrcp.pop %v1239
        %v1283 = vmul.f32 1.0, %v1282
        %v1284 = vrcp.pop %v1240
        %v1285 = vmul.f32 1.0, %v1284
        %v1286 = vrcp.pop %v1241
        %v1287 = vmul.f32 1.0, %v1286
        %v1288 = vrcp.pop %v1242
        %v1289 = vmul.f32 1.0, %v1288
        %v1290 = vrcp.pop %v1243
        %v1291 = vmul.f32 1.0, %v1290
        %v1292 = vrcp.pop %v1244
        %v1293 = vmul.f32 1.0, %v1292
        %v1294 = vrcp.pop %v1245
        %v1295 = vmul.f32 1.0, %v1294
        %v1296 = vrcp.pop %v1246
        %v1297 = vmul.f32 1.0, %v1296
        %v1298 = vrcp.pop %v1247
        %v1299 = vmul.f32 1.0, %v1298
        %v1300 = vrcp.pop %v1248
        %v1301 = vmul.f32 1.0, %v1300
        %v1302 = vrcp.pop %v1249
        %v1303 = vmul.f32 1.0, %v1302
        %v1304 = vrcp.pop %v1250
        %v1305 = vmul.f32 1.0, %v1304
        %v1306 = vrcp.pop %v1251
        %v1307 = vmul.f32 1.0, %v1306
        %v1308 = vrcp.pop %v1252
        %v1309 = vmul.f32 1.0, %v1308
        %v1310 = vrcp.pop %v1253
        %v1311 = vmul.f32 1.0, %v1310
        %v1312 = vrcp.pop %v1254
        %v1313 = vmul.f32 1.0, %v1312
        %v1314 = vrcp.pop %v1255
        %v1315 = vmul.f32 1.0, %v1314
        %v1316 = vrcp.pop %v1256
        %v1317 = vmul.f32 1.0, %v1316
        %v1318 = vrcp.pop %v1257
        %v1319 = vmul.f32 1.0, %v1318
        %v1320 = vrcp.pop %v1258
        %v1321 = vmul.f32 1.0, %v1320
        %v1322 = vrcp.pop %v1259
        %v1323 = vmul.f32 1.0, %v1322
        %vm1324 = vcmask 23552
        %1325 = vst.msk [vmem:[%s280] sm:$0xff] %vm1324, %v1261
        %1326 = vst.msk [vmem:[%s280 + $0x8] sm:$0xff] %vm1324, %v1263
        %1327 = vst.msk [vmem:[%s280 + $0x10] sm:$0xff] %vm1324, %v1265
        %1328 = vst.msk [vmem:[%s280 + $0x18] sm:$0xff] %vm1324, %v1267
        %1329 = vst.msk [vmem:[%s280 + $0x20] sm:$0xff] %vm1324, %v1269
        %1330 = vst.msk [vmem:[%s280 + $0x28] sm:$0xff] %vm1324, %v1271
        %1331 = vst.msk [vmem:[%s280 + $0x30] sm:$0xff] %vm1324, %v1273
        %1332 = vst.msk [vmem:[%s280 + $0x38] sm:$0xff] %vm1324, %v1275
        %1333 = vst.msk [vmem:[%s280 + $0x40] sm:$0xff] %vm1324, %v1277
        %1334 = vst.msk [vmem:[%s280 + $0x48] sm:$0xff] %vm1324, %v1279
        %1335 = vst.msk [vmem:[%s280 + $0x50] sm:$0xff] %vm1324, %v1281
        %1336 = vst.msk [vmem:[%s280 + $0x58] sm:$0xff] %vm1324, %v1283
        %1337 = vst.msk [vmem:[%s280 + $0x60] sm:$0xff] %vm1324, %v1285
        %1338 = vst.msk [vmem:[%s280 + $0x68] sm:$0xff] %vm1324, %v1287
        %1339 = vst.msk [vmem:[%s280 + $0x70] sm:$0xff] %vm1324, %v1289
        %1340 = vst.msk [vmem:[%s280 + $0x78] sm:$0xff] %vm1324, %v1291
        %1341 = vst.msk [vmem:[%s280 + $0x80] sm:$0xff] %vm1324, %v1293
        %1342 = vst.msk [vmem:[%s280 + $0x88] sm:$0xff] %vm1324, %v1295
        %1343 = vst.msk [vmem:[%s280 + $0x90] sm:$0xff] %vm1324, %v1297
        %1344 = vst.msk [vmem:[%s280 + $0x98] sm:$0xff] %vm1324, %v1299
        %1345 = vst.msk [vmem:[%s280 + $0xa0] sm:$0xff] %vm1324, %v1301
        %1346 = vst.msk [vmem:[%s280 + $0xa8] sm:$0xff] %vm1324, %v1303
        %1347 = vst.msk [vmem:[%s280 + $0xb0] sm:$0xff] %vm1324, %v1305
        %1348 = vst.msk [vmem:[%s280 + $0xb8] sm:$0xff] %vm1324, %v1307
        %1349 = vst.msk [vmem:[%s280 + $0xc0] sm:$0xff] %vm1324, %v1309
        %1350 = vst.msk [vmem:[%s280 + $0xc8] sm:$0xff] %vm1324, %v1311
        %1351 = vst.msk [vmem:[%s280 + $0xd0] sm:$0xff] %vm1324, %v1313
        %1352 = vst.msk [vmem:[%s280 + $0xd8] sm:$0xff] %vm1324, %v1315
        %1353 = vst.msk [vmem:[%s280 + $0xe0] sm:$0xff] %vm1324, %v1317
        %1354 = vst.msk [vmem:[%s280 + $0xe8] sm:$0xff] %vm1324, %v1319
        %1355 = vst.msk [vmem:[%s280 + $0xf0] sm:$0xff] %vm1324, %v1321
        %1356 = vst.msk [vmem:[%s280 + $0xf8] sm:$0xff] %vm1324, %v1323
        %s1357 = sand.u32 %s178, 1
        %s1358 = sand.u32 %s178, 1
        %s1359 = smul.addr %s1358, 256
        %s1360 = scalar_lea.vmem [#allocation2], %s1359
        // Predicated region
        $region49: #{tpu_custom_call.1} parent=47 // pred_check
          %p1361 = pneg %p188
        $region50: #{tpu_custom_call.1} parent=47 // pred_check_branch
          %1363 = sbr.rel (%p1361) target = $region52
        $region51: #{tpu_custom_call.1} parent=47 // pred_region
          %s1364 = smul.u32 32, %s18
          %s1365 = ssub.s32 63, %s1364
          %p1366 = scmp.lt.s32.totalorder %s1365, 32
          %s1367 = scalar_select %p1366, %s1365, 32
          %s1368 = smul.u32 128, %s1367
          %p1369 = scmp.ne.s32.totalorder 0, %s1368
          %s1370 = smul.addr %s1364, 8
          %s1371 = scalar_lea.vmem %s7, %s1370
          // Predicated region
          $region53: #{tpu_custom_call.1} parent=51 // pred_check
            %p1372 = pneg %p1369
          $region54: #{tpu_custom_call.1} parent=51 // pred_check_branch
            %1374 = sbr.rel (%p1372) target = $region56
          $region55: #{tpu_custom_call.1} parent=51 // pred_region
            // Predicated region
            $region57: #{tpu_custom_call.1} parent=55 // pred_check
              _
            $region58: #{tpu_custom_call.1} parent=55 // pred_check_branch
              %1376 = sbr.rel (0) target = $region60
            $region59: #{tpu_custom_call.1} parent=55 // pred_region
              // Predicated region
              $region79: #{tpu_custom_call.1} parent=59 // pred_check
                _
              $region80: #{tpu_custom_call.1} parent=59 // pred_check_branch
                %1487 = sbr.rel (0) target = $region82
              $region81: #{tpu_custom_call.1} parent=59 // pred_region
                %s1488 = sshrl.u32 %s1367, 5
                // While loop
                $region83: #{tpu_custom_call.1} parent=81 // loop_pre_header
                  _
                $region84: #{tpu_custom_call.1} parent=81 // loop_header
                  %s1490 = sphi 0, %s1492
                  %p1491 = scmp.ge.s32.totalorder %s1490, %s1488
                  %s1495 = sphi 0, %s1564
                  %s1496 = sphi %s1360, %s1567
                  %s1497 = sphi %s1371, %s1568
                $region85: #{tpu_custom_call.1} parent=81 // loop_header_branch
                  %1494 = sbr.rel (%p1491) target = $region89
                $region86: #{tpu_custom_call.1} parent=81 // loop_body
                  %v1498 = vld [vmem:[%s1496] sm:$0xff]
                  %1499 = vst [vmem:[%s1497] sm:$0xff] %v1498
                  %v1500 = vld [vmem:[%s1496 + $0x8] sm:$0xff]
                  %1501 = vst [vmem:[%s1497 + $0x8] sm:$0xff] %v1500
                  %v1502 = vld [vmem:[%s1496 + $0x10] sm:$0xff]
                  %1503 = vst [vmem:[%s1497 + $0x10] sm:$0xff] %v1502
                  %v1504 = vld [vmem:[%s1496 + $0x18] sm:$0xff]
                  %1505 = vst [vmem:[%s1497 + $0x18] sm:$0xff] %v1504
                  %v1506 = vld [vmem:[%s1496 + $0x20] sm:$0xff]
                  %1507 = vst [vmem:[%s1497 + $0x20] sm:$0xff] %v1506
                  %v1508 = vld [vmem:[%s1496 + $0x28] sm:$0xff]
                  %1509 = vst [vmem:[%s1497 + $0x28] sm:$0xff] %v1508
                  %v1510 = vld [vmem:[%s1496 + $0x30] sm:$0xff]
                  %1511 = vst [vmem:[%s1497 + $0x30] sm:$0xff] %v1510
                  %v1512 = vld [vmem:[%s1496 + $0x38] sm:$0xff]
                  %1513 = vst [vmem:[%s1497 + $0x38] sm:$0xff] %v1512
                  %v1514 = vld [vmem:[%s1496 + $0x40] sm:$0xff]
                  %1515 = vst [vmem:[%s1497 + $0x40] sm:$0xff] %v1514
                  %v1516 = vld [vmem:[%s1496 + $0x48] sm:$0xff]
                  %1517 = vst [vmem:[%s1497 + $0x48] sm:$0xff] %v1516
                  %v1518 = vld [vmem:[%s1496 + $0x50] sm:$0xff]
                  %1519 = vst [vmem:[%s1497 + $0x50] sm:$0xff] %v1518
                  %v1520 = vld [vmem:[%s1496 + $0x58] sm:$0xff]
                  %1521 = vst [vmem:[%s1497 + $0x58] sm:$0xff] %v1520
                  %v1522 = vld [vmem:[%s1496 + $0x60] sm:$0xff]
                  %1523 = vst [vmem:[%s1497 + $0x60] sm:$0xff] %v1522
                  %v1524 = vld [vmem:[%s1496 + $0x68] sm:$0xff]
                  %1525 = vst [vmem:[%s1497 + $0x68] sm:$0xff] %v1524
                  %v1526 = vld [vmem:[%s1496 + $0x70] sm:$0xff]
                  %1527 = vst [vmem:[%s1497 + $0x70] sm:$0xff] %v1526
                  %v1528 = vld [vmem:[%s1496 + $0x78] sm:$0xff]
                  %1529 = vst [vmem:[%s1497 + $0x78] sm:$0xff] %v1528
                  %v1530 = vld [vmem:[%s1496 + $0x80] sm:$0xff]
                  %1531 = vst [vmem:[%s1497 + $0x80] sm:$0xff] %v1530
                  %v1532 = vld [vmem:[%s1496 + $0x88] sm:$0xff]
                  %1533 = vst [vmem:[%s1497 + $0x88] sm:$0xff] %v1532
                  %v1534 = vld [vmem:[%s1496 + $0x90] sm:$0xff]
                  %1535 = vst [vmem:[%s1497 + $0x90] sm:$0xff] %v1534
                  %v1536 = vld [vmem:[%s1496 + $0x98] sm:$0xff]
                  %1537 = vst [vmem:[%s1497 + $0x98] sm:$0xff] %v1536
                  %v1538 = vld [vmem:[%s1496 + $0xa0] sm:$0xff]
                  %1539 = vst [vmem:[%s1497 + $0xa0] sm:$0xff] %v1538
                  %v1540 = vld [vmem:[%s1496 + $0xa8] sm:$0xff]
                  %1541 = vst [vmem:[%s1497 + $0xa8] sm:$0xff] %v1540
                  %v1542 = vld [vmem:[%s1496 + $0xb0] sm:$0xff]
                  %1543 = vst [vmem:[%s1497 + $0xb0] sm:$0xff] %v1542
                  %v1544 = vld [vmem:[%s1496 + $0xb8] sm:$0xff]
                  %1545 = vst [vmem:[%s1497 + $0xb8] sm:$0xff] %v1544
                  %v1546 = vld [vmem:[%s1496 + $0xc0] sm:$0xff]
                  %1547 = vst [vmem:[%s1497 + $0xc0] sm:$0xff] %v1546
                  %v1548 = vld [vmem:[%s1496 + $0xc8] sm:$0xff]
                  %1549 = vst [vmem:[%s1497 + $0xc8] sm:$0xff] %v1548
                  %v1550 = vld [vmem:[%s1496 + $0xd0] sm:$0xff]
                  %1551 = vst [vmem:[%s1497 + $0xd0] sm:$0xff] %v1550
                  %v1552 = vld [vmem:[%s1496 + $0xd8] sm:$0xff]
                  %1553 = vst [vmem:[%s1497 + $0xd8] sm:$0xff] %v1552
                  %v1554 = vld [vmem:[%s1496 + $0xe0] sm:$0xff]
                  %1555 = vst [vmem:[%s1497 + $0xe0] sm:$0xff] %v1554
                  %v1556 = vld [vmem:[%s1496 + $0xe8] sm:$0xff]
                  %1557 = vst [vmem:[%s1497 + $0xe8] sm:$0xff] %v1556
                  %v1558 = vld [vmem:[%s1496 + $0xf0] sm:$0xff]
                  %1559 = vst [vmem:[%s1497 + $0xf0] sm:$0xff] %v1558
                  %v1560 = vld [vmem:[%s1496 + $0xf8] sm:$0xff]
                  %1561 = vst [vmem:[%s1497 + $0xf8] sm:$0xff] %v1560
                  %s1562 = sadd.s32 1, %s1495
                  %p1563 = scmp.ge.s32.totalorder %s1562, %s1488
                  %s1564 = scalar_select %p1563, 0, %s1562
                  %s1565 = smul.u32 %s1564, 256
                  %s1566 = smul.u32 %s1564, 256
                  %s1567 = scalar_lea.vmem %s1360, %s1565 [#allocation2]
                  %s1568 = scalar_lea.vmem %s1371, %s1566
                $region87: #{tpu_custom_call.1} parent=81 // loop_footer
                  %s1492 = sadd.s32 %s1490, 1
                $region88: #{tpu_custom_call.1} parent=81 // loop_footer_branch
                  %1489 = sbr.rel target = $region84
                $region89: #{tpu_custom_call.1} parent=81 // loop_exit
                  _
                %s1569 = sshrl.u32 %s1367, 5
                %s1570 = sand.u32 %s1367, 31
                %s1571 = smul.u32 %s1569, 32
                %s1572 = smul.u32 8, %s1571
                %s1573 = scalar_lea.vmem %s1360, %s1572 [#allocation2]
                %s1574 = smul.u32 8, %s1571
                %s1575 = scalar_lea.vmem %s1371, %s1574
                // While loop
                $region90: #{tpu_custom_call.1} parent=81 // loop_pre_header
                  _
                $region91: #{tpu_custom_call.1} parent=81 // loop_header
                  %s1577 = sphi 0, %s1579
                  %p1578 = scmp.ge.s32.totalorder %s1577, %s1570
                  %s1582 = sphi 0, %s1589
                  %s1583 = sphi %s1573, %s1592
                  %s1584 = sphi %s1575, %s1593
                $region92: #{tpu_custom_call.1} parent=81 // loop_header_branch
                  %1581 = sbr.rel (%p1578) target = $region96
                $region93: #{tpu_custom_call.1} parent=81 // loop_body
                  %v1585 = vld [vmem:[%s1583] sm:$0xff]
                  %1586 = vst [vmem:[%s1584] sm:$0xff] %v1585
                  %s1587 = sadd.s32 1, %s1582
                  %p1588 = scmp.ge.s32.totalorder %s1587, %s1570
                  %s1589 = scalar_select %p1588, 0, %s1587
                  %s1590 = smul.u32 %s1589, 8
                  %s1591 = smul.u32 %s1589, 8
                  %s1592 = scalar_lea.vmem %s1573, %s1590 [#allocation2]
                  %s1593 = scalar_lea.vmem %s1575, %s1591
                $region94: #{tpu_custom_call.1} parent=81 // loop_footer
                  %s1579 = sadd.s32 %s1577, 1
                $region95: #{tpu_custom_call.1} parent=81 // loop_footer_branch
                  %1576 = sbr.rel target = $region91
                $region96: #{tpu_custom_call.1} parent=81 // loop_exit
                  _
              $region82: #{tpu_custom_call.1} parent=59 // pred_fallthru
                _
              // Predicated region
              $region97: #{tpu_custom_call.1} parent=59 // pred_check
                _
              $region98: #{tpu_custom_call.1} parent=59 // pred_check_branch
                %1595 = sbr.rel target = $region100
              $region99: #{tpu_custom_call.1} parent=59 // pred_region
                _
              $region100: #{tpu_custom_call.1} parent=59 // pred_fallthru
                _
            $region60: #{tpu_custom_call.1} parent=55 // pred_fallthru
              _
            // Predicated region
            $region61: #{tpu_custom_call.1} parent=55 // pred_check
              _
            $region62: #{tpu_custom_call.1} parent=55 // pred_check_branch
              %1378 = sbr.rel target = $region64
            $region63: #{tpu_custom_call.1} parent=55 // pred_region
              %s1380 = sshrl.u32 %s1367, 5
              // While loop
              $region65: #{tpu_custom_call.1} parent=63 // loop_pre_header
                _
              $region66: #{tpu_custom_call.1} parent=63 // loop_header
                %s1382 = sphi 0, %s1384
                %p1383 = scmp.ge.s32.totalorder %s1382, %s1380
                %s1387 = sphi 0, %s1456
                %s1388 = sphi %s1360, %s1459
                %s1389 = sphi %s1371, %s1460
              $region67: #{tpu_custom_call.1} parent=63 // loop_header_branch
                %1386 = sbr.rel (%p1383) target = $region71
              $region68: #{tpu_custom_call.1} parent=63 // loop_body
                %v1390 = vld [vmem:[%s1388] sm:$0xff]
                %1391 = vst [vmem:[%s1389] sm:$0xff] %v1390
                %v1392 = vld [vmem:[%s1388 + $0x8] sm:$0xff]
                %1393 = vst [vmem:[%s1389 + $0x8] sm:$0xff] %v1392
                %v1394 = vld [vmem:[%s1388 + $0x10] sm:$0xff]
                %1395 = vst [vmem:[%s1389 + $0x10] sm:$0xff] %v1394
                %v1396 = vld [vmem:[%s1388 + $0x18] sm:$0xff]
                %1397 = vst [vmem:[%s1389 + $0x18] sm:$0xff] %v1396
                %v1398 = vld [vmem:[%s1388 + $0x20] sm:$0xff]
                %1399 = vst [vmem:[%s1389 + $0x20] sm:$0xff] %v1398
                %v1400 = vld [vmem:[%s1388 + $0x28] sm:$0xff]
                %1401 = vst [vmem:[%s1389 + $0x28] sm:$0xff] %v1400
                %v1402 = vld [vmem:[%s1388 + $0x30] sm:$0xff]
                %1403 = vst [vmem:[%s1389 + $0x30] sm:$0xff] %v1402
                %v1404 = vld [vmem:[%s1388 + $0x38] sm:$0xff]
                %1405 = vst [vmem:[%s1389 + $0x38] sm:$0xff] %v1404
                %v1406 = vld [vmem:[%s1388 + $0x40] sm:$0xff]
                %1407 = vst [vmem:[%s1389 + $0x40] sm:$0xff] %v1406
                %v1408 = vld [vmem:[%s1388 + $0x48] sm:$0xff]
                %1409 = vst [vmem:[%s1389 + $0x48] sm:$0xff] %v1408
                %v1410 = vld [vmem:[%s1388 + $0x50] sm:$0xff]
                %1411 = vst [vmem:[%s1389 + $0x50] sm:$0xff] %v1410
                %v1412 = vld [vmem:[%s1388 + $0x58] sm:$0xff]
                %1413 = vst [vmem:[%s1389 + $0x58] sm:$0xff] %v1412
                %v1414 = vld [vmem:[%s1388 + $0x60] sm:$0xff]
                %1415 = vst [vmem:[%s1389 + $0x60] sm:$0xff] %v1414
                %v1416 = vld [vmem:[%s1388 + $0x68] sm:$0xff]
                %1417 = vst [vmem:[%s1389 + $0x68] sm:$0xff] %v1416
                %v1418 = vld [vmem:[%s1388 + $0x70] sm:$0xff]
                %1419 = vst [vmem:[%s1389 + $0x70] sm:$0xff] %v1418
                %v1420 = vld [vmem:[%s1388 + $0x78] sm:$0xff]
                %1421 = vst [vmem:[%s1389 + $0x78] sm:$0xff] %v1420
                %v1422 = vld [vmem:[%s1388 + $0x80] sm:$0xff]
                %1423 = vst [vmem:[%s1389 + $0x80] sm:$0xff] %v1422
                %v1424 = vld [vmem:[%s1388 + $0x88] sm:$0xff]
                %1425 = vst [vmem:[%s1389 + $0x88] sm:$0xff] %v1424
                %v1426 = vld [vmem:[%s1388 + $0x90] sm:$0xff]
                %1427 = vst [vmem:[%s1389 + $0x90] sm:$0xff] %v1426
                %v1428 = vld [vmem:[%s1388 + $0x98] sm:$0xff]
                %1429 = vst [vmem:[%s1389 + $0x98] sm:$0xff] %v1428
                %v1430 = vld [vmem:[%s1388 + $0xa0] sm:$0xff]
                %1431 = vst [vmem:[%s1389 + $0xa0] sm:$0xff] %v1430
                %v1432 = vld [vmem:[%s1388 + $0xa8] sm:$0xff]
                %1433 = vst [vmem:[%s1389 + $0xa8] sm:$0xff] %v1432
                %v1434 = vld [vmem:[%s1388 + $0xb0] sm:$0xff]
                %1435 = vst [vmem:[%s1389 + $0xb0] sm:$0xff] %v1434
                %v1436 = vld [vmem:[%s1388 + $0xb8] sm:$0xff]
                %1437 = vst [vmem:[%s1389 + $0xb8] sm:$0xff] %v1436
                %v1438 = vld [vmem:[%s1388 + $0xc0] sm:$0xff]
                %1439 = vst [vmem:[%s1389 + $0xc0] sm:$0xff] %v1438
                %v1440 = vld [vmem:[%s1388 + $0xc8] sm:$0xff]
                %1441 = vst [vmem:[%s1389 + $0xc8] sm:$0xff] %v1440
                %v1442 = vld [vmem:[%s1388 + $0xd0] sm:$0xff]
                %1443 = vst [vmem:[%s1389 + $0xd0] sm:$0xff] %v1442
                %v1444 = vld [vmem:[%s1388 + $0xd8] sm:$0xff]
                %1445 = vst [vmem:[%s1389 + $0xd8] sm:$0xff] %v1444
                %v1446 = vld [vmem:[%s1388 + $0xe0] sm:$0xff]
                %1447 = vst [vmem:[%s1389 + $0xe0] sm:$0xff] %v1446
                %v1448 = vld [vmem:[%s1388 + $0xe8] sm:$0xff]
                %1449 = vst [vmem:[%s1389 + $0xe8] sm:$0xff] %v1448
                %v1450 = vld [vmem:[%s1388 + $0xf0] sm:$0xff]
                %1451 = vst [vmem:[%s1389 + $0xf0] sm:$0xff] %v1450
                %v1452 = vld [vmem:[%s1388 + $0xf8] sm:$0xff]
                %1453 = vst [vmem:[%s1389 + $0xf8] sm:$0xff] %v1452
                %s1454 = sadd.s32 1, %s1387
                %p1455 = scmp.ge.s32.totalorder %s1454, %s1380
                %s1456 = scalar_select %p1455, 0, %s1454
                %s1457 = smul.u32 %s1456, 256
                %s1458 = smul.u32 %s1456, 256
                %s1459 = scalar_lea.vmem %s1360, %s1457 [#allocation2]
                %s1460 = scalar_lea.vmem %s1371, %s1458
              $region69: #{tpu_custom_call.1} parent=63 // loop_footer
                %s1384 = sadd.s32 %s1382, 1
              $region70: #{tpu_custom_call.1} parent=63 // loop_footer_branch
                %1381 = sbr.rel target = $region66
              $region71: #{tpu_custom_call.1} parent=63 // loop_exit
                _
              %s1461 = sshrl.u32 %s1367, 5
              %s1462 = sand.u32 %s1367, 31
              %s1463 = smul.u32 %s1461, 32
              %s1464 = smul.u32 8, %s1463
              %s1465 = scalar_lea.vmem %s1360, %s1464 [#allocation2]
              %s1466 = smul.u32 8, %s1463
              %s1467 = scalar_lea.vmem %s1371, %s1466
              // While loop
              $region72: #{tpu_custom_call.1} parent=63 // loop_pre_header
                _
              $region73: #{tpu_custom_call.1} parent=63 // loop_header
                %s1469 = sphi 0, %s1471
                %p1470 = scmp.ge.s32.totalorder %s1469, %s1462
                %s1474 = sphi 0, %s1481
                %s1475 = sphi %s1465, %s1484
                %s1476 = sphi %s1467, %s1485
              $region74: #{tpu_custom_call.1} parent=63 // loop_header_branch
                %1473 = sbr.rel (%p1470) target = $region78
              $region75: #{tpu_custom_call.1} parent=63 // loop_body
                %v1477 = vld [vmem:[%s1475] sm:$0xff]
                %1478 = vst [vmem:[%s1476] sm:$0xff] %v1477
                %s1479 = sadd.s32 1, %s1474
                %p1480 = scmp.ge.s32.totalorder %s1479, %s1462
                %s1481 = scalar_select %p1480, 0, %s1479
                %s1482 = smul.u32 %s1481, 8
                %s1483 = smul.u32 %s1481, 8
                %s1484 = scalar_lea.vmem %s1465, %s1482 [#allocation2]
                %s1485 = scalar_lea.vmem %s1467, %s1483
              $region76: #{tpu_custom_call.1} parent=63 // loop_footer
                %s1471 = sadd.s32 %s1469, 1
              $region77: #{tpu_custom_call.1} parent=63 // loop_footer_branch
                %1468 = sbr.rel target = $region73
              $region78: #{tpu_custom_call.1} parent=63 // loop_exit
                _
            $region64: #{tpu_custom_call.1} parent=55 // pred_fallthru
              _
          $region56: #{tpu_custom_call.1} parent=51 // pred_fallthru
            _
          %1596 = vnop
        $region52: #{tpu_custom_call.1} parent=47 // pred_fallthru
          _
      $region48: #{tpu_custom_call.1} parent=5 // pred_fallthru
        _
      %p1597 = scmp.le.s32.totalorder 2, %s13
      // Predicated region
      $region101: #{tpu_custom_call.1} parent=5 // pred_check
        %p1598 = pneg %p1597
      $region102: #{tpu_custom_call.1} parent=5 // pred_check_branch
        %1600 = sbr.rel (%p1598) target = $region104
      $region103: #{tpu_custom_call.1} parent=5 // pred_region
        %s1601 = ssub.s32 %s13, 2
        // Predicated region
        $region105: #{tpu_custom_call.1} parent=103 // pred_check
          %p1602 = pneg %p194
        $region106: #{tpu_custom_call.1} parent=103 // pred_check_branch
          %1604 = sbr.rel (%p1602) target = $region108
        $region107: #{tpu_custom_call.1} parent=103 // pred_region
          %s1605 = sand.u32 %s179, 1
          %s1606 = sand.u32 %s179, 1
          %s1607 = smul.addr %s1606, 256
          %s1608 = scalar_lea.vmem [#allocation2], %s1607
        $region108: #{tpu_custom_call.1} parent=103 // pred_fallthru
          _
      $region104: #{tpu_custom_call.1} parent=5 // pred_fallthru
        _
    $region6: #{tpu_custom_call.1} parent=1 // loop_footer
      %s17 = sadd.s32 1, %s13
    $region7: #{tpu_custom_call.1} parent=1 // loop_footer_branch
      %12 = sbr.rel target = $region3
    $region8: #{tpu_custom_call.1} parent=1 // loop_exit
      _

</llo_original>
